<compile_context>
chip_gen: v6e
topology: v6e:2x2x1
jax: 0.10.0
libtpu: 0.0.40
codegen_flags: <defaults>
</compile_context>

<pallas_src>
import jax
import jax.numpy as jnp
from jax.experimental import pallas as pl
from jax.experimental.pallas import tpu as pltpu


def _round_up(n, m):
    return ((n + m - 1) // m) * m


def _vmem_capacity_bytes():
    """Physical VMEM per TensorCore; conservative fallback if unqueryable."""
    try:
        return int(pltpu.get_tpu_info().vmem_capacity_bytes)
    except Exception:
        return 64 * 1024 * 1024  # v7x is the smallest (64 MiB); v5e/v6e have 128 MiB


# ---------------------------------------------------------------------------
# Fused Pallas kernel: mixer stand-in + Classifier (three 1x1 convs), NCT-native
# ---------------------------------------------------------------------------

def _fused_head_kernel(x_ref, wmix_ref, bmix_ref, w1_ref, b1_ref, w2_ref,
                       b2_ref, cf_ref, feat_ref, y_ref):
    # x block: (1, Cin, tT) -- channels on sublanes, time on lanes (torch NCT).
    # Cast to the weight dtype in-kernel so the wrapper never materialises a
    # casted copy of the activation slab in HBM.
    x = x_ref[0].astype(wmix_ref.dtype)

    # Stage 1 (TemporalEncoder + Temporal_Mixer stand-in, 1x1 projection).
    cf = jnp.dot(wmix_ref[...], x, preferred_element_type=jnp.float32)
    cf = cf + bmix_ref[...]
    cf_ref[0] = cf.astype(cf_ref.dtype)

    # Stage 2 (Classifier.linear_fuse, Conv1d k=1).
    feat = jnp.dot(w1_ref[...], cf.astype(w1_ref.dtype),
                   preferred_element_type=jnp.float32)
    feat = feat + b1_ref[...]
    feat_ref[0] = feat.astype(feat_ref.dtype)

    # nn.Dropout == identity (eval mode).
    # Stage 3 (Classifier.linear_pred, Conv1d k=1).
    y = jnp.dot(w2_ref[...], feat.astype(w2_ref.dtype),
                preferred_element_type=jnp.float32)
    y = y + b2_ref[...]
    y_ref[0] = y.astype(y_ref.dtype)


def _build_fused_head(B, cin, t_tile, n_t_tiles, e4p, ep, ncp, in_dtype,
                      out_dtype, vmem_limit_bytes, single_buffer_weights):
    # TODO(synk): for extreme in_feat_dim (>~8K at bf16 on v7x) add a K grid
    # axis ("arbitrary", last) with a VMEM f32 accumulator instead of keeping
    # the whole (e4p, cin) weight resident.
    T_pad = t_tile * n_t_tiles
    in_bpe = jnp.dtype(in_dtype).itemsize
    out_bpe = jnp.dtype(out_dtype).itemsize
    flops = 2 * B * T_pad * (cin * e4p + e4p * ep + ep * ncp)
    bytes_accessed = (B * T_pad * (cin * in_bpe + (e4p + ep + ncp) * out_bpe)
                      + 2 * (e4p * (cin + 1) + ep * (e4p + 1) + ncp * (ep + 1)))
    cost = pl.CostEstimate(flops=int(flops), transcendentals=0,
                           bytes_accessed=int(bytes_accessed))

    w_kwargs = {}
    if single_buffer_weights:
        # Grid-invariant operands: one VMEM buffer is enough (never re-DMA'd).
        w_kwargs = dict(pipeline_mode=pl.Buffered(1))

    def w_spec(shape):
        return pl.BlockSpec(shape, lambda b, t: (0, 0), **w_kwargs)

    return pl.pallas_call(
        _fused_head_kernel,
        out_shape=(
            jax.ShapeDtypeStruct((B, e4p, T_pad), out_dtype),
            jax.ShapeDtypeStruct((B, ep, T_pad), out_dtype),
            jax.ShapeDtypeStruct((B, ncp, T_pad), out_dtype),
        ),
        grid_spec=pltpu.PrefetchScalarGridSpec(
            num_scalar_prefetch=0,
            grid=(B, n_t_tiles),
            in_specs=[
                pl.BlockSpec((1, cin, t_tile), lambda b, t: (b, 0, t)),
                w_spec((e4p, cin)),
                w_spec((e4p, 1)),
                w_spec((ep, e4p)),
                w_spec((ep, 1)),
                w_spec((ncp, ep)),
                w_spec((ncp, 1)),
            ],
            out_specs=[
                pl.BlockSpec((1, e4p, t_tile), lambda b, t: (b, 0, t)),
                pl.BlockSpec((1, ep, t_tile), lambda b, t: (b, 0, t)),
                pl.BlockSpec((1, ncp, t_tile), lambda b, t: (b, 0, t)),
            ],
        ),
        compiler_params=pltpu.CompilerParams(
            dimension_semantics=("parallel", "parallel"),
            vmem_limit_bytes=int(vmem_limit_bytes),
        ),
        cost_estimate=cost,
    )


def fused_head(x, w_mix_t, b_mix, w1_t, b1, w2_t, b2, *, t_tile, out_dtype,
               vmem_limit_bytes):
    """x: (B, cin, T_pad) with T_pad % t_tile == 0.  Returns padded cf/feat/y."""
    B, cin, T_pad = x.shape
    assert T_pad % t_tile == 0
    e4p, ep, ncp = w_mix_t.shape[0], w1_t.shape[0], w2_t.shape[0]
    args = (x, w_mix_t, b_mix, w1_t, b1, w2_t, b2)
    common = (B, cin, t_tile, T_pad // t_tile, e4p, ep, ncp, x.dtype, out_dtype,
              vmem_limit_bytes)
    try:
        return _build_fused_head(*common, single_buffer_weights=True)(*args)
    except Exception:
        # Installed jax may not support pipeline_mode=pl.Buffered(1); fall back
        # to default double-buffered weights (same semantics, a bit more VMEM).
        return _build_fused_head(*common, single_buffer_weights=False)(*args)


# ---------------------------------------------------------------------------
# Tiling plan helpers
# ---------------------------------------------------------------------------

def _pick_t_tile(T, t_cap, want_multi):
    """Choose a time-tile (multiple of 128, or full T) with bounded padding."""
    t_cap = max(128, (t_cap // 128) * 128)
    full_ok = t_cap >= T
    if full_ok and not want_multi:
        return T, T
    best = None
    upper = min(t_cap, _round_up(T, 128))
    for t in range(128, upper + 1, 128):
        T_pad = _round_up(T, t)
        if want_multi and T_pad // t < 2:
            continue
        key = (T_pad, -t)  # minimise padding waste, then prefer bigger tiles
        if best is None or key < best[0]:
            best = (key, t, T_pad)
    if best is None:
        return (T, T) if full_ok else (128, _round_up(T, 128))
    _, t, T_pad = best
    if full_ok and want_multi and (T_pad - T) > max(T // 3, 1):
        return T, T  # splitting for the 2nd TensorCore not worth the padding
    return t, T_pad


# ---------------------------------------------------------------------------
# VideoNas wrapper (thin JAX glue around the fused Pallas kernel)
# ---------------------------------------------------------------------------

class VideoNasPallas:
    """JAX/Pallas port of the MS-TCT `VideoNas` head (forward / eval mode)."""

    def __init__(self, loss_type, in_feat_dim, final_embedding_dim,
                 num_tool=6, num_verb=10, num_target=15, num_triplet=100,
                 seed=0, compute_dtype=jnp.bfloat16, out_dtype=None,
                 max_t_tile=2048):
        self.loss_type = loss_type
        self.E = final_embedding_dim
        self.compute_dtype = jnp.dtype(compute_dtype)
        self.out_dtype = (jnp.dtype(out_dtype) if out_dtype is not None
                          else self.compute_dtype)
        self.max_t_tile = max_t_tile
        self.num_classes = {"i": num_tool, "v": num_verb,
                            "t": num_target, "ivt": num_triplet}
        nc = self.num_classes[loss_type]
        E4 = 4 * final_embedding_dim

        # Channel dims live on sublanes; align to the packed-sublane
        # granularity of the compute dtype (8 rows f32, 16 rows bf16, 32 for
        # 8-bit) instead of 128 -- keeps feat/y writeback lean.
        self.ch_align = max(8, 32 // self.compute_dtype.itemsize)
        self.cin = in_feat_dim
        self.e4 = E4
        self.e4_p = _round_up(E4, self.ch_align)
        self.e_p = _round_up(final_embedding_dim, self.ch_align)
        self.nc = nc
        self.nc_p = _round_up(nc, self.ch_align)

        key = jax.random.PRNGKey(seed)
        ks = jax.random.split(key, 6)

        def _padded(k, shape, padded_shape):
            w = 0.02 * jax.random.normal(k, shape, jnp.float32)
            pads = [(0, p - s) for s, p in zip(shape, padded_shape)]
            return jnp.pad(w, pads).astype(self.compute_dtype)

        # Weights stored pre-transposed as (out_ch, in_ch): the kernel computes
        # W @ X directly on NCT slabs (zero activation transposes).
        # TODO(synk): TemporalEncoder + Temporal_Mixer definitions are not
        # provided; a deterministic 1x1 projection (in_feat_dim -> 4E, same T)
        # stands in for them so the (B, 4E, T) concat_feature contract holds.
        self.w_mix_t = _padded(ks[0], (E4, in_feat_dim), (self.e4_p, in_feat_dim))
        self.b_mix = _padded(ks[1], (E4, 1), (self.e4_p, 1))
        # Classifier: linear_fuse Conv1d(4E -> E, k=1), linear_pred Conv1d(E -> nc, k=1)
        self.w1_t = _padded(ks[2], (final_embedding_dim, E4), (self.e_p, self.e4_p))
        self.b1 = _padded(ks[3], (final_embedding_dim, 1), (self.e_p, 1))
        self.w2_t = _padded(ks[4], (nc, final_embedding_dim), (self.nc_p, self.e_p))
        self.b2 = _padded(ks[5], (nc, 1), (self.nc_p, 1))

    def _plan(self, B, T, in_itemsize):
        """VMEM-budgeted T-tile + scoped-VMEM limit (v7x 64 MiB is the binding case)."""
        bpe = self.compute_dtype.itemsize
        out_bpe = self.out_dtype.itemsize
        weight_bytes = bpe * (self.e4_p * (self.cin + 1)
                              + self.e_p * (self.e4_p + 1)
                              + self.nc_p * (self.e_p + 1))
        capacity = _vmem_capacity_bytes()
        vmem_limit = int(min(capacity, 128 * 1024 * 1024) * 0.75)
        # Bytes per unit of T: double-buffered input tile + double-buffered outputs.
        per_t = (2 * self.cin * in_itemsize
                 + 2 * (self.e4_p + self.e_p + self.nc_p) * out_bpe)
        # Reserve weights twice (in case Buffered(1) is unsupported and they end
        # up double-buffered) plus 2 MiB slack for compiler scratch.
        budget = vmem_limit - 2 * weight_bytes - (2 << 20)
        t_cap = max(128, (budget // max(per_t, 1)) // 128 * 128)
        t_cap = min(t_cap, self.max_t_tile)
        # v7x has 2 TensorCores; guarantee >= 2 parallel grid steps when the
        # batch axis alone cannot provide them.
        want_multi = (B == 1 and T > 128)
        t_tile, T_pad = _pick_t_tile(T, t_cap, want_multi)
        return t_tile, T_pad, vmem_limit

    def __call__(self, inputs):
        # inputs: (B, in_feat_dim, T) -- torch NCT layout.  nn.Dropout == identity.
        B, cin, T = inputs.shape
        assert cin == self.cin

        t_tile, T_pad, vmem_limit = self._plan(B, T, jnp.dtype(inputs.dtype).itemsize)
        x = inputs
        if T_pad != T:
            x = jnp.pad(x, ((0, 0), (0, 0), (0, T_pad - T)))

        # ---- single fused Pallas call: mixer stand-in + classifier ----
        cf_p, feat_p, y_p = fused_head(
            x, self.w_mix_t, self.b_mix, self.w1_t, self.b1, self.w2_t, self.b2,
            t_tile=t_tile, out_dtype=self.out_dtype, vmem_limit_bytes=vmem_limit)

        # Outputs are already in the torch layouts (no big transposes):
        #   concat_feature (B, 4E, T), feat (B, E, T); only the narrow logits
        #   need the (0, 2, 1) permute the torch Classifier applies.
        concat_feature = cf_p[:, :self.e4, :T]
        feat = feat_p[:, :self.E, :T]
        y = jnp.transpose(y_p[:, :self.nc, :T], (0, 2, 1)).astype(jnp.float32)

        # ---- default (unused) heads, matching the torch zero tensors ----
        y_ivt = jnp.zeros((B, T, 100), jnp.float32)
        y_i = jnp.zeros((B, T, 6), jnp.float32)
        y_v = jnp.zeros((B, T, 10), jnp.float32)
        y_t = jnp.zeros((B, T, 15), jnp.float32)
        feat_i = feat_v = feat_t = concat_feature

        if self.loss_type == "i":
            y_i, feat_i = y, feat
        if self.loss_type == "v":
            y_v, feat_v = y, feat
        if self.loss_type == "t":
            y_t, feat_t = y, feat
        if self.loss_type == "ivt":
            y_ivt = y  # torch returns (y_ivt, concat_feature) hard-coded below

        # Matches the PyTorch forward exactly: the 4th pair is always
        # (y_ivt, concat_feature).
        return ((y_i, feat_i), (y_v, feat_v), (y_t, feat_t),
                (y_ivt, concat_feature))


# ---------------------------------------------------------------------------
# Main
# ---------------------------------------------------------------------------

if __name__ == "__main__":
    B, in_feat_dim, T = 2, 64, 8
    final_embedding_dim = 32

    key = jax.random.PRNGKey(0)
    inputs = jax.random.normal(key, (B, in_feat_dim, T), jnp.float32)

    model = VideoNasPallas(
        loss_type="ivt",
        in_feat_dim=in_feat_dim,
        final_embedding_dim=final_embedding_dim,
    )

    out = model(inputs)
    out = jax.block_until_ready(out)

    (y_i, f_i), (y_v, f_v), (y_t, f_t), (y_ivt, cf) = out
    assert y_ivt.shape == (B, T, 100)
    assert y_i.shape == (B, T, 6)
    assert y_v.shape == (B, T, 10)
    assert y_t.shape == (B, T, 15)
    assert f_i.shape == (B, 4 * final_embedding_dim, T)
    assert cf.shape == (B, 4 * final_embedding_dim, T)
    assert bool(jnp.all(jnp.isfinite(y_ivt)))
    assert bool(jnp.all(jnp.isfinite(cf.astype(jnp.float32))))
    print("KERNEL_OK")
</pallas_src>

<mosaic_0001>
module attributes {stable_mosaic.version = 11 : i64} {
  func.func @_fused_head_kernel(%arg0: i32, %arg1: i32, %arg2: memref<1x64x8xf32, #tpu.memory_space<vmem>>, %arg3: memref<128x64xbf16, #tpu.memory_space<vmem>>, %arg4: memref<128x1xbf16, #tpu.memory_space<vmem>>, %arg5: memref<32x128xbf16, #tpu.memory_space<vmem>>, %arg6: memref<32x1xbf16, #tpu.memory_space<vmem>>, %arg7: memref<112x32xbf16, #tpu.memory_space<vmem>>, %arg8: memref<112x1xbf16, #tpu.memory_space<vmem>>, %arg9: memref<1x128x8xbf16, #tpu.memory_space<vmem>>, %arg10: memref<1x32x8xbf16, #tpu.memory_space<vmem>>, %arg11: memref<1x112x8xbf16, #tpu.memory_space<vmem>>) attributes {dimension_semantics = [#tpu.dimension_semantics<parallel>, #tpu.dimension_semantics<parallel>], iteration_bounds = array<i64: 2, 1>, scalar_prefetch = 0 : i64, scratch_operands = 0 : i64, tpu.core_type = #tpu.core_type<tc>, window_params = [{transform_indices = @transform_0, window_bounds = array<i64: 1, 64, 8>}, {pipeline_mode = #tpu.pipeline_mode<synchronous>, transform_indices = @transform_1, window_bounds = array<i64: 128, 64>}, {pipeline_mode = #tpu.pipeline_mode<synchronous>, transform_indices = @transform_2, window_bounds = array<i64: 128, 1>}, {pipeline_mode = #tpu.pipeline_mode<synchronous>, transform_indices = @transform_3, window_bounds = array<i64: 32, 128>}, {pipeline_mode = #tpu.pipeline_mode<synchronous>, transform_indices = @transform_4, window_bounds = array<i64: 32, 1>}, {pipeline_mode = #tpu.pipeline_mode<synchronous>, transform_indices = @transform_5, window_bounds = array<i64: 112, 32>}, {pipeline_mode = #tpu.pipeline_mode<synchronous>, transform_indices = @transform_6, window_bounds = array<i64: 112, 1>}, {transform_indices = @transform_7, window_bounds = array<i64: 1, 128, 8>}, {transform_indices = @transform_8, window_bounds = array<i64: 1, 32, 8>}, {transform_indices = @transform_9, window_bounds = array<i64: 1, 112, 8>}]} {
    %c0 = arith.constant 0 : index
    %c0_0 = arith.constant 0 : index
    %c0_1 = arith.constant 0 : index
    %0 = vector.load %arg2[%c0, %c0_0, %c0_1] : memref<1x64x8xf32, #tpu.memory_space<vmem>>, vector<1x64x8xf32>
    %1 = vector.shape_cast %0 : vector<1x64x8xf32> to vector<64x8xf32>
    %2 = arith.truncf %1 : vector<64x8xf32> to vector<64x8xbf16>
    %c0_2 = arith.constant 0 : index
    %c0_3 = arith.constant 0 : index
    %3 = vector.load %arg3[%c0_2, %c0_3] : memref<128x64xbf16, #tpu.memory_space<vmem>>, vector<128x64xbf16>
    %cst = arith.constant dense<0.000000e+00> : vector<128x8xf32>
    %4 = tpu.matmul %3, %2, %cst {dimension_numbers = #tpu.dot_dimension_numbers<[1], [0], [0], [1], [0, 0, 1, 1], [], []>} : vector<128x64xbf16>, vector<64x8xbf16>, vector<128x8xf32> -> vector<128x8xf32>
    %c0_4 = arith.constant 0 : index
    %c0_5 = arith.constant 0 : index
    %5 = vector.load %arg4[%c0_4, %c0_5] : memref<128x1xbf16, #tpu.memory_space<vmem>>, vector<128x1xbf16>
    %6 = arith.extf %5 : vector<128x1xbf16> to vector<128x1xf32>
    %7 = vector.broadcast %6 : vector<128x1xf32> to vector<128x8xf32>
    %8 = arith.addf %4, %7 : vector<128x8xf32>
    %9 = arith.truncf %8 : vector<128x8xf32> to vector<128x8xbf16>
    %c0_6 = arith.constant 0 : index
    %c0_7 = arith.constant 0 : index
    %c0_8 = arith.constant 0 : index
    %10 = vector.load %arg9[%c0_6, %c0_7, %c0_8] : memref<1x128x8xbf16, #tpu.memory_space<vmem>>, vector<1x128x8xbf16>
    %11 = vector.shape_cast %10 : vector<1x128x8xbf16> to vector<128x8xbf16>
    %12 = vector.shape_cast %9 : vector<128x8xbf16> to vector<1x128x8xbf16>
    tpu.vector_store %arg9[%c0_6, %c0_7, %c0_8], %12 {strides = array<i32>} : memref<1x128x8xbf16, #tpu.memory_space<vmem>>, vector<1x128x8xbf16>,
    %c0_9 = arith.constant 0 : index
    %c0_10 = arith.constant 0 : index
    %13 = vector.load %arg5[%c0_9, %c0_10] : memref<32x128xbf16, #tpu.memory_space<vmem>>, vector<32x128xbf16>
    %14 = arith.truncf %8 : vector<128x8xf32> to vector<128x8xbf16>
    %cst_11 = arith.constant dense<0.000000e+00> : vector<32x8xf32>
    %15 = tpu.matmul %13, %14, %cst_11 {dimension_numbers = #tpu.dot_dimension_numbers<[1], [0], [0], [1], [0, 0, 1, 1], [], []>} : vector<32x128xbf16>, vector<128x8xbf16>, vector<32x8xf32> -> vector<32x8xf32>
    %c0_12 = arith.constant 0 : index
    %c0_13 = arith.constant 0 : index
    %16 = vector.load %arg6[%c0_12, %c0_13] : memref<32x1xbf16, #tpu.memory_space<vmem>>, vector<32x1xbf16>
    %17 = arith.extf %16 : vector<32x1xbf16> to vector<32x1xf32>
    %18 = vector.broadcast %17 : vector<32x1xf32> to vector<32x8xf32>
    %19 = arith.addf %15, %18 : vector<32x8xf32>
    %20 = arith.truncf %19 : vector<32x8xf32> to vector<32x8xbf16>
    %c0_14 = arith.constant 0 : index
    %c0_15 = arith.constant 0 : index
    %c0_16 = arith.constant 0 : index
    %21 = vector.load %arg10[%c0_14, %c0_15, %c0_16] : memref<1x32x8xbf16, #tpu.memory_space<vmem>>, vector<1x32x8xbf16>
    %22 = vector.shape_cast %21 : vector<1x32x8xbf16> to vector<32x8xbf16>
    %23 = vector.shape_cast %20 : vector<32x8xbf16> to vector<1x32x8xbf16>
    tpu.vector_store %arg10[%c0_14, %c0_15, %c0_16], %23 {strides = array<i32>} : memref<1x32x8xbf16, #tpu.memory_space<vmem>>, vector<1x32x8xbf16>,
    %c0_17 = arith.constant 0 : index
    %c0_18 = arith.constant 0 : index
    %24 = vector.load %arg7[%c0_17, %c0_18] : memref<112x32xbf16, #tpu.memory_space<vmem>>, vector<112x32xbf16>
    %25 = arith.truncf %19 : vector<32x8xf32> to vector<32x8xbf16>
    %cst_19 = arith.constant dense<0.000000e+00> : vector<112x8xf32>
    %26 = tpu.matmul %24, %25, %cst_19 {dimension_numbers = #tpu.dot_dimension_numbers<[1], [0], [0], [1], [0, 0, 1, 1], [], []>} : vector<112x32xbf16>, vector<32x8xbf16>, vector<112x8xf32> -> vector<112x8xf32>
    %c0_20 = arith.constant 0 : index
    %c0_21 = arith.constant 0 : index
    %27 = vector.load %arg8[%c0_20, %c0_21] : memref<112x1xbf16, #tpu.memory_space<vmem>>, vector<112x1xbf16>
    %28 = arith.extf %27 : vector<112x1xbf16> to vector<112x1xf32>
    %29 = vector.broadcast %28 : vector<112x1xf32> to vector<112x8xf32>
    %30 = arith.addf %26, %29 : vector<112x8xf32>
    %31 = arith.truncf %30 : vector<112x8xf32> to vector<112x8xbf16>
    %c0_22 = arith.constant 0 : index
    %c0_23 = arith.constant 0 : index
    %c0_24 = arith.constant 0 : index
    %32 = vector.load %arg11[%c0_22, %c0_23, %c0_24] : memref<1x112x8xbf16, #tpu.memory_space<vmem>>, vector<1x112x8xbf16>
    %33 = vector.shape_cast %32 : vector<1x112x8xbf16> to vector<112x8xbf16>
    %34 = vector.shape_cast %31 : vector<112x8xbf16> to vector<1x112x8xbf16>
    tpu.vector_store %arg11[%c0_22, %c0_23, %c0_24], %34 {strides = array<i32>} : memref<1x112x8xbf16, #tpu.memory_space<vmem>>, vector<1x112x8xbf16>,
    return
  }
  func.func @transform_0(%arg0: i32, %arg1: i32) -> (i32, i32, i32) {
    %c0_i32 = arith.constant 0 : i32
    %c0_i32_0 = arith.constant 0 : i32
    return %arg0, %c0_i32, %arg1 : i32, i32, i32
  }
  func.func @transform_1(%arg0: i32, %arg1: i32) -> (i32, i32) {
    %c0_i32 = arith.constant 0 : i32
    %c0_i32_0 = arith.constant 0 : i32
    %c0_i32_1 = arith.constant 0 : i32
    return %c0_i32, %c0_i32_0 : i32, i32
  }
  func.func @transform_2(%arg0: i32, %arg1: i32) -> (i32, i32) {
    %c0_i32 = arith.constant 0 : i32
    %c0_i32_0 = arith.constant 0 : i32
    %c0_i32_1 = arith.constant 0 : i32
    return %c0_i32, %c0_i32_0 : i32, i32
  }
  func.func @transform_3(%arg0: i32, %arg1: i32) -> (i32, i32) {
    %c0_i32 = arith.constant 0 : i32
    %c0_i32_0 = arith.constant 0 : i32
    %c0_i32_1 = arith.constant 0 : i32
    return %c0_i32, %c0_i32_0 : i32, i32
  }
  func.func @transform_4(%arg0: i32, %arg1: i32) -> (i32, i32) {
    %c0_i32 = arith.constant 0 : i32
    %c0_i32_0 = arith.constant 0 : i32
    %c0_i32_1 = arith.constant 0 : i32
    return %c0_i32, %c0_i32_0 : i32, i32
  }
  func.func @transform_5(%arg0: i32, %arg1: i32) -> (i32, i32) {
    %c0_i32 = arith.constant 0 : i32
    %c0_i32_0 = arith.constant 0 : i32
    %c0_i32_1 = arith.constant 0 : i32
    return %c0_i32, %c0_i32_0 : i32, i32
  }
  func.func @transform_6(%arg0: i32, %arg1: i32) -> (i32, i32) {
    %c0_i32 = arith.constant 0 : i32
    %c0_i32_0 = arith.constant 0 : i32
    %c0_i32_1 = arith.constant 0 : i32
    return %c0_i32, %c0_i32_0 : i32, i32
  }
  func.func @transform_7(%arg0: i32, %arg1: i32) -> (i32, i32, i32) {
    %c0_i32 = arith.constant 0 : i32
    %c0_i32_0 = arith.constant 0 : i32
    return %arg0, %c0_i32, %arg1 : i32, i32, i32
  }
  func.func @transform_8(%arg0: i32, %arg1: i32) -> (i32, i32, i32) {
    %c0_i32 = arith.constant 0 : i32
    %c0_i32_0 = arith.constant 0 : i32
    return %arg0, %c0_i32, %arg1 : i32, i32, i32
  }
  func.func @transform_9(%arg0: i32, %arg1: i32) -> (i32, i32, i32) {
    %c0_i32 = arith.constant 0 : i32
    %c0_i32_0 = arith.constant 0 : i32
    return %arg0, %c0_i32, %arg1 : i32, i32, i32
  }
}

module attributes {stable_mosaic.version = 11 : i64} {
  func.func @_fused_head_kernel(%arg0: i32, %arg1: i32, %arg2: memref<1x64x8xf32, #tpu.memory_space<vmem>>, %arg3: memref<128x64xbf16, #tpu.memory_space<vmem>>, %arg4: memref<128x1xbf16, #tpu.memory_space<vmem>>, %arg5: memref<32x128xbf16, #tpu.memory_space<vmem>>, %arg6: memref<32x1xbf16, #tpu.memory_space<vmem>>, %arg7: memref<112x32xbf16, #tpu.memory_space<vmem>>, %arg8: memref<112x1xbf16, #tpu.memory_space<vmem>>, %arg9: memref<1x128x8xbf16, #tpu.memory_space<vmem>>, %arg10: memref<1x32x8xbf16, #tpu.memory_space<vmem>>, %arg11: memref<1x112x8xbf16, #tpu.memory_space<vmem>>) attributes {dimension_semantics = [#tpu.dimension_semantics<parallel>, #tpu.dimension_semantics<parallel>], iteration_bounds = array<i64: 2, 1>, scalar_prefetch = 0 : i64, scratch_operands = 0 : i64, tpu.core_type = #tpu.core_type<tc>, window_params = [{transform_indices = @transform_0, window_bounds = array<i64: 1, 64, 8>}, {pipeline_mode = #tpu.pipeline_mode<synchronous>, transform_indices = @transform_1, window_bounds = array<i64: 128, 64>}, {pipeline_mode = #tpu.pipeline_mode<synchronous>, transform_indices = @transform_2, window_bounds = array<i64: 128, 1>}, {pipeline_mode = #tpu.pipeline_mode<synchronous>, transform_indices = @transform_3, window_bounds = array<i64: 32, 128>}, {pipeline_mode = #tpu.pipeline_mode<synchronous>, transform_indices = @transform_4, window_bounds = array<i64: 32, 1>}, {pipeline_mode = #tpu.pipeline_mode<synchronous>, transform_indices = @transform_5, window_bounds = array<i64: 112, 32>}, {pipeline_mode = #tpu.pipeline_mode<synchronous>, transform_indices = @transform_6, window_bounds = array<i64: 112, 1>}, {transform_indices = @transform_7, window_bounds = array<i64: 1, 128, 8>}, {transform_indices = @transform_8, window_bounds = array<i64: 1, 32, 8>}, {transform_indices = @transform_9, window_bounds = array<i64: 1, 112, 8>}]} {
    %c0 = arith.constant 0 : index
    %c0_0 = arith.constant 0 : index
    %c0_1 = arith.constant 0 : index
    %0 = vector.load %arg2[%c0, %c0_0, %c0_1] : memref<1x64x8xf32, #tpu.memory_space<vmem>>, vector<1x64x8xf32>
    %1 = vector.shape_cast %0 : vector<1x64x8xf32> to vector<64x8xf32>
    %2 = arith.truncf %1 : vector<64x8xf32> to vector<64x8xbf16>
    %c0_2 = arith.constant 0 : index
    %c0_3 = arith.constant 0 : index
    %3 = vector.load %arg3[%c0_2, %c0_3] : memref<128x64xbf16, #tpu.memory_space<vmem>>, vector<128x64xbf16>
    %cst = arith.constant dense<0.000000e+00> : vector<128x8xf32>
    %4 = tpu.matmul %3, %2, %cst {dimension_numbers = #tpu.dot_dimension_numbers<[1], [0], [0], [1], [0, 0, 1, 1], [], []>} : vector<128x64xbf16>, vector<64x8xbf16>, vector<128x8xf32> -> vector<128x8xf32>
    %c0_4 = arith.constant 0 : index
    %c0_5 = arith.constant 0 : index
    %5 = vector.load %arg4[%c0_4, %c0_5] : memref<128x1xbf16, #tpu.memory_space<vmem>>, vector<128x1xbf16>
    %6 = arith.extf %5 : vector<128x1xbf16> to vector<128x1xf32>
    %7 = vector.broadcast %6 : vector<128x1xf32> to vector<128x8xf32>
    %8 = arith.addf %4, %7 : vector<128x8xf32>
    %9 = arith.truncf %8 : vector<128x8xf32> to vector<128x8xbf16>
    %c0_6 = arith.constant 0 : index
    %c0_7 = arith.constant 0 : index
    %c0_8 = arith.constant 0 : index
    %10 = vector.load %arg9[%c0_6, %c0_7, %c0_8] : memref<1x128x8xbf16, #tpu.memory_space<vmem>>, vector<1x128x8xbf16>
    %11 = vector.shape_cast %10 : vector<1x128x8xbf16> to vector<128x8xbf16>
    %12 = vector.shape_cast %9 : vector<128x8xbf16> to vector<1x128x8xbf16>
    tpu.vector_store %arg9[%c0_6, %c0_7, %c0_8], %12 {strides = array<i32>} : memref<1x128x8xbf16, #tpu.memory_space<vmem>>, vector<1x128x8xbf16>,
    %c0_9 = arith.constant 0 : index
    %c0_10 = arith.constant 0 : index
    %13 = vector.load %arg5[%c0_9, %c0_10] : memref<32x128xbf16, #tpu.memory_space<vmem>>, vector<32x128xbf16>
    %14 = arith.truncf %8 : vector<128x8xf32> to vector<128x8xbf16>
    %cst_11 = arith.constant dense<0.000000e+00> : vector<32x8xf32>
    %15 = tpu.matmul %13, %14, %cst_11 {dimension_numbers = #tpu.dot_dimension_numbers<[1], [0], [0], [1], [0, 0, 1, 1], [], []>} : vector<32x128xbf16>, vector<128x8xbf16>, vector<32x8xf32> -> vector<32x8xf32>
    %c0_12 = arith.constant 0 : index
    %c0_13 = arith.constant 0 : index
    %16 = vector.load %arg6[%c0_12, %c0_13] : memref<32x1xbf16, #tpu.memory_space<vmem>>, vector<32x1xbf16>
    %17 = arith.extf %16 : vector<32x1xbf16> to vector<32x1xf32>
    %18 = vector.broadcast %17 : vector<32x1xf32> to vector<32x8xf32>
    %19 = arith.addf %15, %18 : vector<32x8xf32>
    %20 = arith.truncf %19 : vector<32x8xf32> to vector<32x8xbf16>
    %c0_14 = arith.constant 0 : index
    %c0_15 = arith.constant 0 : index
    %c0_16 = arith.constant 0 : index
    %21 = vector.load %arg10[%c0_14, %c0_15, %c0_16] : memref<1x32x8xbf16, #tpu.memory_space<vmem>>, vector<1x32x8xbf16>
    %22 = vector.shape_cast %21 : vector<1x32x8xbf16> to vector<32x8xbf16>
    %23 = vector.shape_cast %20 : vector<32x8xbf16> to vector<1x32x8xbf16>
    tpu.vector_store %arg10[%c0_14, %c0_15, %c0_16], %23 {strides = array<i32>} : memref<1x32x8xbf16, #tpu.memory_space<vmem>>, vector<1x32x8xbf16>,
    %c0_17 = arith.constant 0 : index
    %c0_18 = arith.constant 0 : index
    %24 = vector.load %arg7[%c0_17, %c0_18] : memref<112x32xbf16, #tpu.memory_space<vmem>>, vector<112x32xbf16>
    %25 = arith.truncf %19 : vector<32x8xf32> to vector<32x8xbf16>
    %cst_19 = arith.constant dense<0.000000e+00> : vector<112x8xf32>
    %26 = tpu.matmul %24, %25, %cst_19 {dimension_numbers = #tpu.dot_dimension_numbers<[1], [0], [0], [1], [0, 0, 1, 1], [], []>} : vector<112x32xbf16>, vector<32x8xbf16>, vector<112x8xf32> -> vector<112x8xf32>
    %c0_20 = arith.constant 0 : index
    %c0_21 = arith.constant 0 : index
    %27 = vector.load %arg8[%c0_20, %c0_21] : memref<112x1xbf16, #tpu.memory_space<vmem>>, vector<112x1xbf16>
    %28 = arith.extf %27 : vector<112x1xbf16> to vector<112x1xf32>
    %29 = vector.broadcast %28 : vector<112x1xf32> to vector<112x8xf32>
    %30 = arith.addf %26, %29 : vector<112x8xf32>
    %31 = arith.truncf %30 : vector<112x8xf32> to vector<112x8xbf16>
    %c0_22 = arith.constant 0 : index
    %c0_23 = arith.constant 0 : index
    %c0_24 = arith.constant 0 : index
    %32 = vector.load %arg11[%c0_22, %c0_23, %c0_24] : memref<1x112x8xbf16, #tpu.memory_space<vmem>>, vector<1x112x8xbf16>
    %33 = vector.shape_cast %32 : vector<1x112x8xbf16> to vector<112x8xbf16>
    %34 = vector.shape_cast %31 : vector<112x8xbf16> to vector<1x112x8xbf16>
    tpu.vector_store %arg11[%c0_22, %c0_23, %c0_24], %34 {strides = array<i32>} : memref<1x112x8xbf16, #tpu.memory_space<vmem>>, vector<1x112x8xbf16>,
    return
  }
  func.func @transform_0(%arg0: i32, %arg1: i32) -> (i32, i32, i32) {
    %c0_i32 = arith.constant 0 : i32
    %c0_i32_0 = arith.constant 0 : i32
    return %arg0, %c0_i32, %arg1 : i32, i32, i32
  }
  func.func @transform_1(%arg0: i32, %arg1: i32) -> (i32, i32) {
    %c0_i32 = arith.constant 0 : i32
    %c0_i32_0 = arith.constant 0 : i32
    %c0_i32_1 = arith.constant 0 : i32
    return %c0_i32, %c0_i32_0 : i32, i32
  }
  func.func @transform_2(%arg0: i32, %arg1: i32) -> (i32, i32) {
    %c0_i32 = arith.constant 0 : i32
    %c0_i32_0 = arith.constant 0 : i32
    %c0_i32_1 = arith.constant 0 : i32
    return %c0_i32, %c0_i32_0 : i32, i32
  }
  func.func @transform_3(%arg0: i32, %arg1: i32) -> (i32, i32) {
    %c0_i32 = arith.constant 0 : i32
    %c0_i32_0 = arith.constant 0 : i32
    %c0_i32_1 = arith.constant 0 : i32
    return %c0_i32, %c0_i32_0 : i32, i32
  }
  func.func @transform_4(%arg0: i32, %arg1: i32) -> (i32, i32) {
    %c0_i32 = arith.constant 0 : i32
    %c0_i32_0 = arith.constant 0 : i32
    %c0_i32_1 = arith.constant 0 : i32
    return %c0_i32, %c0_i32_0 : i32, i32
  }
  func.func @transform_5(%arg0: i32, %arg1: i32) -> (i32, i32) {
    %c0_i32 = arith.constant 0 : i32
    %c0_i32_0 = arith.constant 0 : i32
    %c0_i32_1 = arith.constant 0 : i32
    return %c0_i32, %c0_i32_0 : i32, i32
  }
  func.func @transform_6(%arg0: i32, %arg1: i32) -> (i32, i32) {
    %c0_i32 = arith.constant 0 : i32
    %c0_i32_0 = arith.constant 0 : i32
    %c0_i32_1 = arith.constant 0 : i32
    return %c0_i32, %c0_i32_0 : i32, i32
  }
  func.func @transform_7(%arg0: i32, %arg1: i32) -> (i32, i32, i32) {
    %c0_i32 = arith.constant 0 : i32
    %c0_i32_0 = arith.constant 0 : i32
    return %arg0, %c0_i32, %arg1 : i32, i32, i32
  }
  func.func @transform_8(%arg0: i32, %arg1: i32) -> (i32, i32, i32) {
    %c0_i32 = arith.constant 0 : i32
    %c0_i32_0 = arith.constant 0 : i32
    return %arg0, %c0_i32, %arg1 : i32, i32, i32
  }
  func.func @transform_9(%arg0: i32, %arg1: i32) -> (i32, i32, i32) {
    %c0_i32 = arith.constant 0 : i32
    %c0_i32_0 = arith.constant 0 : i32
    return %arg0, %c0_i32, %arg1 : i32, i32, i32
  }
}

</mosaic_0001>

<llo_original>
// kernel: tpu_custom_call.1
$region0: #{tpu_custom_call.1}
  #allocation0 [shape = 'u32[]', space=smem, size = 0x4, offset = 0x4, fixed_abs, tag = 'smem constant byte address 0x4 - core index']
  #allocation1 [shape = 'u32[144,128]{1,0:T(1,128)}', space=vmem, size = 0x12000, scoped, tag = 'internal scratch']
  %s0 = inlined_call_operand.vmem [shape: f32[2,64,8], index: 0, kind: input, shape index: {}]
  %s1 = inlined_call_operand.vmem [shape: bf16[128,64], index: 1, kind: input, shape index: {}]
  %s2 = inlined_call_operand.vmem [shape: bf16[128,1], index: 2, kind: input, shape index: {}]
  %s3 = inlined_call_operand.vmem [shape: bf16[32,128], index: 3, kind: input, shape index: {}]
  %s4 = inlined_call_operand.vmem [shape: bf16[32,1], index: 4, kind: input, shape index: {}]
  %s5 = inlined_call_operand.vmem [shape: bf16[112,32], index: 5, kind: input, shape index: {}]
  %s6 = inlined_call_operand.vmem [shape: bf16[112,1], index: 6, kind: input, shape index: {}]
  %s7 = inlined_call_operand.vmem [shape: bf16[2,128,8], index: 7, kind: output, shape index: {0}]
  %s8 = inlined_call_operand.vmem [shape: bf16[2,32,8], index: 8, kind: output, shape index: {1}]
  %s9 = inlined_call_operand.vmem [shape: bf16[2,112,8], index: 9, kind: output, shape index: {2}]
  %10 = xla_tuple %s7, %s8, %s9
  %s11 = sld [smem:[#allocation0]]
  $region77: #{tpu_custom_call.1} parent=0
    _
  %s13 = ssub.s32 1, %s11
  %s14 = scalar_select 0, %s13, %s11
  loop: start=0, step=1, limit=4
  $region2: #{tpu_custom_call.1} parent=0 // loop_pre_header
    _
  $region3: #{tpu_custom_call.1} parent=0 // loop_header
    %s16 = sphi 0, %s20
    %p17 = scmp.ge.s32.totalorder %s16, 4
    %s23 = sphi 0, %s35
    %s24 = sphi 0, %s31
    %s25 = sphi 0, %s23
    %s26 = sphi 0, %s24
    %s27 = sphi 0, %s25
    %s28 = sphi 0, %s26
    %s40 = sphi 0, %s42
    %s43 = sphi 0, %s40
    %s44 = sphi 0, %s43
    %s60 = sphi 0, %s44
    %s64 = sphi 0, %s64
    %s66 = sphi 0, %s64
    %s67 = sphi 0, %s66
    %s81 = sphi 0, %s67
    %s85 = sphi 0, %s85
    %s87 = sphi 0, %s85
    %s88 = sphi 0, %s87
    %s102 = sphi 0, %s88
    %s106 = sphi 0, %s106
    %s108 = sphi 0, %s106
    %s109 = sphi 0, %s108
    %s123 = sphi 0, %s109
    %s127 = sphi 0, %s127
    %s129 = sphi 0, %s127
    %s130 = sphi 0, %s129
    %s144 = sphi 0, %s130
    %s148 = sphi 0, %s148
    %s150 = sphi 0, %s148
    %s151 = sphi 0, %s150
    %s165 = sphi 0, %s151
    %s169 = sphi 0, %s169
    %s171 = sphi 0, %s169
    %s172 = sphi 0, %s171
    %s186 = sphi 0, %s172
    %s194 = sphi 0, %s196
    %s197 = sphi 0, %s194
    %s198 = sphi 0, %s197
    %s214 = sphi 0, %s198
    %s222 = sphi 0, %s224
    %s225 = sphi 0, %s222
    %s226 = sphi 0, %s225
    %s242 = sphi 0, %s226
    %s250 = sphi 0, %s252
    %s253 = sphi 0, %s250
    %s254 = sphi 0, %s253
    %s270 = sphi 0, %s254
  $region4: #{tpu_custom_call.1} parent=0 // loop_header_branch
    %19 = sbr.rel (%p17) target = $region8
  $region5: #{tpu_custom_call.1} parent=0 // loop_body
    %s21 = ssub.s32 %s16, 1
    %s22 = ssub.s32 %s16, 2
    %s29 = sadd.s32 1, %s24
    %p30 = scmp.ge.s32.totalorder %s29, 1
    %s31 = scalar_select %p30, 0, %s29
    %s32 = sadd.s32 1, %s23
    %s33 = scalar_select %p30, %s32, %s23
    %p34 = scmp.ge.s32.totalorder %s33, 2
    %s35 = scalar_select %p34, 0, %s33
    %s36 = ssub.s32 %s23, %s35
    %s37 = ssub.s32 %s24, %s31
    %s38 = sor.u32 %s36, %s37
    %p39 = scmp.eq.s32.totalorder %s38, 0
    %s41 = sadd.s32 %s40, 1
    %s42 = scalar_select %p39, %s40, %s41
    %p45 = pneg %p39
    %p46 = scmp.eq.s32.totalorder %s16, 1
    %p47 = por %p45, %p46
    %p48 = scmp.ne.s32.totalorder %s40, %s43
    %p49 = scmp.eq.s32.totalorder %s16, 0
    %p50 = por %p48, %p49
    %p51 = scmp.ne.s32.totalorder %s40, %s43
    %p52 = scmp.eq.s32.totalorder %s21, 1
    %p53 = por %p51, %p52
    %p54 = scmp.ne.s32.totalorder %s43, %s44
    %p55 = scmp.eq.s32.totalorder %s21, 0
    %p56 = por %p54, %p55
    %p57 = scmp.ne.s32.totalorder %s43, %s44
    %p58 = scmp.eq.s32.totalorder %s22, 1
    %p59 = por %p57, %p58
    %p61 = scmp.ne.s32.totalorder %s44, %s60
    %p62 = scmp.eq.s32.totalorder %s22, 0
    %p63 = por %p61, %p62
    %s65 = sadd.s32 %s64, 1
    %p68 = scmp.eq.s32.totalorder %s16, 1
    %p69 = scmp.ne.s32.totalorder %s64, %s66
    %p70 = scmp.eq.s32.totalorder %s16, 0
    %p71 = por %p69, %p70
    %p72 = scmp.ne.s32.totalorder %s64, %s66
    %p73 = scmp.eq.s32.totalorder %s21, 1
    %p74 = por %p72, %p73
    %p75 = scmp.ne.s32.totalorder %s66, %s67
    %p76 = scmp.eq.s32.totalorder %s21, 0
    %p77 = por %p75, %p76
    %p78 = scmp.ne.s32.totalorder %s66, %s67
    %p79 = scmp.eq.s32.totalorder %s22, 1
    %p80 = por %p78, %p79
    %p82 = scmp.ne.s32.totalorder %s67, %s81
    %p83 = scmp.eq.s32.totalorder %s22, 0
    %p84 = por %p82, %p83
    %s86 = sadd.s32 %s85, 1
    %p89 = scmp.eq.s32.totalorder %s16, 1
    %p90 = scmp.ne.s32.totalorder %s85, %s87
    %p91 = scmp.eq.s32.totalorder %s16, 0
    %p92 = por %p90, %p91
    %p93 = scmp.ne.s32.totalorder %s85, %s87
    %p94 = scmp.eq.s32.totalorder %s21, 1
    %p95 = por %p93, %p94
    %p96 = scmp.ne.s32.totalorder %s87, %s88
    %p97 = scmp.eq.s32.totalorder %s21, 0
    %p98 = por %p96, %p97
    %p99 = scmp.ne.s32.totalorder %s87, %s88
    %p100 = scmp.eq.s32.totalorder %s22, 1
    %p101 = por %p99, %p100
    %p103 = scmp.ne.s32.totalorder %s88, %s102
    %p104 = scmp.eq.s32.totalorder %s22, 0
    %p105 = por %p103, %p104
    %s107 = sadd.s32 %s106, 1
    %p110 = scmp.eq.s32.totalorder %s16, 1
    %p111 = scmp.ne.s32.totalorder %s106, %s108
    %p112 = scmp.eq.s32.totalorder %s16, 0
    %p113 = por %p111, %p112
    %p114 = scmp.ne.s32.totalorder %s106, %s108
    %p115 = scmp.eq.s32.totalorder %s21, 1
    %p116 = por %p114, %p115
    %p117 = scmp.ne.s32.totalorder %s108, %s109
    %p118 = scmp.eq.s32.totalorder %s21, 0
    %p119 = por %p117, %p118
    %p120 = scmp.ne.s32.totalorder %s108, %s109
    %p121 = scmp.eq.s32.totalorder %s22, 1
    %p122 = por %p120, %p121
    %p124 = scmp.ne.s32.totalorder %s109, %s123
    %p125 = scmp.eq.s32.totalorder %s22, 0
    %p126 = por %p124, %p125
    %s128 = sadd.s32 %s127, 1
    %p131 = scmp.eq.s32.totalorder %s16, 1
    %p132 = scmp.ne.s32.totalorder %s127, %s129
    %p133 = scmp.eq.s32.totalorder %s16, 0
    %p134 = por %p132, %p133
    %p135 = scmp.ne.s32.totalorder %s127, %s129
    %p136 = scmp.eq.s32.totalorder %s21, 1
    %p137 = por %p135, %p136
    %p138 = scmp.ne.s32.totalorder %s129, %s130
    %p139 = scmp.eq.s32.totalorder %s21, 0
    %p140 = por %p138, %p139
    %p141 = scmp.ne.s32.totalorder %s129, %s130
    %p142 = scmp.eq.s32.totalorder %s22, 1
    %p143 = por %p141, %p142
    %p145 = scmp.ne.s32.totalorder %s130, %s144
    %p146 = scmp.eq.s32.totalorder %s22, 0
    %p147 = por %p145, %p146
    %s149 = sadd.s32 %s148, 1
    %p152 = scmp.eq.s32.totalorder %s16, 1
    %p153 = scmp.ne.s32.totalorder %s148, %s150
    %p154 = scmp.eq.s32.totalorder %s16, 0
    %p155 = por %p153, %p154
    %p156 = scmp.ne.s32.totalorder %s148, %s150
    %p157 = scmp.eq.s32.totalorder %s21, 1
    %p158 = por %p156, %p157
    %p159 = scmp.ne.s32.totalorder %s150, %s151
    %p160 = scmp.eq.s32.totalorder %s21, 0
    %p161 = por %p159, %p160
    %p162 = scmp.ne.s32.totalorder %s150, %s151
    %p163 = scmp.eq.s32.totalorder %s22, 1
    %p164 = por %p162, %p163
    %p166 = scmp.ne.s32.totalorder %s151, %s165
    %p167 = scmp.eq.s32.totalorder %s22, 0
    %p168 = por %p166, %p167
    %s170 = sadd.s32 %s169, 1
    %p173 = scmp.eq.s32.totalorder %s16, 1
    %p174 = scmp.ne.s32.totalorder %s169, %s171
    %p175 = scmp.eq.s32.totalorder %s16, 0
    %p176 = por %p174, %p175
    %p177 = scmp.ne.s32.totalorder %s169, %s171
    %p178 = scmp.eq.s32.totalorder %s21, 1
    %p179 = por %p177, %p178
    %p180 = scmp.ne.s32.totalorder %s171, %s172
    %p181 = scmp.eq.s32.totalorder %s21, 0
    %p182 = por %p180, %p181
    %p183 = scmp.ne.s32.totalorder %s171, %s172
    %p184 = scmp.eq.s32.totalorder %s22, 1
    %p185 = por %p183, %p184
    %p187 = scmp.ne.s32.totalorder %s172, %s186
    %p188 = scmp.eq.s32.totalorder %s22, 0
    %p189 = por %p187, %p188
    %s190 = ssub.s32 %s23, %s35
    %s191 = ssub.s32 %s24, %s31
    %s192 = sor.u32 %s190, %s191
    %p193 = scmp.eq.s32.totalorder %s192, 0
    %s195 = sadd.s32 %s194, 1
    %s196 = scalar_select %p193, %s194, %s195
    %p199 = pneg %p193
    %p200 = scmp.eq.s32.totalorder %s16, 1
    %p201 = por %p199, %p200
    %p202 = scmp.ne.s32.totalorder %s194, %s197
    %p203 = scmp.eq.s32.totalorder %s16, 0
    %p204 = por %p202, %p203
    %p205 = scmp.ne.s32.totalorder %s194, %s197
    %p206 = scmp.eq.s32.totalorder %s21, 1
    %p207 = por %p205, %p206
    %p208 = scmp.ne.s32.totalorder %s197, %s198
    %p209 = scmp.eq.s32.totalorder %s21, 0
    %p210 = por %p208, %p209
    %p211 = scmp.ne.s32.totalorder %s197, %s198
    %p212 = scmp.eq.s32.totalorder %s22, 1
    %p213 = por %p211, %p212
    %p215 = scmp.ne.s32.totalorder %s198, %s214
    %p216 = scmp.eq.s32.totalorder %s22, 0
    %p217 = por %p215, %p216
    %s218 = ssub.s32 %s23, %s35
    %s219 = ssub.s32 %s24, %s31
    %s220 = sor.u32 %s218, %s219
    %p221 = scmp.eq.s32.totalorder %s220, 0
    %s223 = sadd.s32 %s222, 1
    %s224 = scalar_select %p221, %s222, %s223
    %p227 = pneg %p221
    %p228 = scmp.eq.s32.totalorder %s16, 1
    %p229 = por %p227, %p228
    %p230 = scmp.ne.s32.totalorder %s222, %s225
    %p231 = scmp.eq.s32.totalorder %s16, 0
    %p232 = por %p230, %p231
    %p233 = scmp.ne.s32.totalorder %s222, %s225
    %p234 = scmp.eq.s32.totalorder %s21, 1
    %p235 = por %p233, %p234
    %p236 = scmp.ne.s32.totalorder %s225, %s226
    %p237 = scmp.eq.s32.totalorder %s21, 0
    %p238 = por %p236, %p237
    %p239 = scmp.ne.s32.totalorder %s225, %s226
    %p240 = scmp.eq.s32.totalorder %s22, 1
    %p241 = por %p239, %p240
    %p243 = scmp.ne.s32.totalorder %s226, %s242
    %p244 = scmp.eq.s32.totalorder %s22, 0
    %p245 = por %p243, %p244
    %s246 = ssub.s32 %s23, %s35
    %s247 = ssub.s32 %s24, %s31
    %s248 = sor.u32 %s246, %s247
    %p249 = scmp.eq.s32.totalorder %s248, 0
    %s251 = sadd.s32 %s250, 1
    %s252 = scalar_select %p249, %s250, %s251
    %p255 = pneg %p249
    %p256 = scmp.eq.s32.totalorder %s16, 1
    %p257 = por %p255, %p256
    %p258 = scmp.ne.s32.totalorder %s250, %s253
    %p259 = scmp.eq.s32.totalorder %s16, 0
    %p260 = por %p258, %p259
    %p261 = scmp.ne.s32.totalorder %s250, %s253
    %p262 = scmp.eq.s32.totalorder %s21, 1
    %p263 = por %p261, %p262
    %p264 = scmp.ne.s32.totalorder %s253, %s254
    %p265 = scmp.eq.s32.totalorder %s21, 0
    %p266 = por %p264, %p265
    %p267 = scmp.ne.s32.totalorder %s253, %s254
    %p268 = scmp.eq.s32.totalorder %s22, 1
    %p269 = por %p267, %p268
    %p271 = scmp.ne.s32.totalorder %s254, %s270
    %p272 = scmp.eq.s32.totalorder %s22, 0
    %p273 = por %p271, %p272
    %p274 = scmp.le.s32.totalorder 1, %s16
    %p275 = scmp.lt.s32.totalorder %s16, 3
    %p276 = pnand %p274, %p275
    %p277 = pneg %p276
    // Predicated region
    $region9: #{tpu_custom_call.1} parent=5 // pred_check
      _
    $region10: #{tpu_custom_call.1} parent=5 // pred_check_branch
      %279 = sbr.rel (%p276) target = $region12
    $region11: #{tpu_custom_call.1} parent=5 // pred_region
      %s280 = ssub.s32 %s16, 1
      // Predicated region
      $region13: #{tpu_custom_call.1} parent=11 // pred_check
        %p281 = pneg %p77
      $region14: #{tpu_custom_call.1} parent=11 // pred_check_branch
        %283 = sbr.rel (%p281) target = $region16
      $region15: #{tpu_custom_call.1} parent=11 // pred_region
        _
      $region16: #{tpu_custom_call.1} parent=11 // pred_fallthru
        _
      // Predicated region
      $region17: #{tpu_custom_call.1} parent=11 // pred_check
        %p284 = pneg %p98
      $region18: #{tpu_custom_call.1} parent=11 // pred_check_branch
        %286 = sbr.rel (%p284) target = $region20
      $region19: #{tpu_custom_call.1} parent=11 // pred_region
        _
      $region20: #{tpu_custom_call.1} parent=11 // pred_fallthru
        _
      // Predicated region
      $region21: #{tpu_custom_call.1} parent=11 // pred_check
        %p287 = pneg %p119
      $region22: #{tpu_custom_call.1} parent=11 // pred_check_branch
        %289 = sbr.rel (%p287) target = $region24
      $region23: #{tpu_custom_call.1} parent=11 // pred_region
        _
      $region24: #{tpu_custom_call.1} parent=11 // pred_fallthru
        _
      // Predicated region
      $region25: #{tpu_custom_call.1} parent=11 // pred_check
        %p290 = pneg %p140
      $region26: #{tpu_custom_call.1} parent=11 // pred_check_branch
        %292 = sbr.rel (%p290) target = $region28
      $region27: #{tpu_custom_call.1} parent=11 // pred_region
        _
      $region28: #{tpu_custom_call.1} parent=11 // pred_fallthru
        _
      // Predicated region
      $region29: #{tpu_custom_call.1} parent=11 // pred_check
        %p293 = pneg %p161
      $region30: #{tpu_custom_call.1} parent=11 // pred_check_branch
        %295 = sbr.rel (%p293) target = $region32
      $region31: #{tpu_custom_call.1} parent=11 // pred_region
        _
      $region32: #{tpu_custom_call.1} parent=11 // pred_fallthru
        _
      // Predicated region
      $region33: #{tpu_custom_call.1} parent=11 // pred_check
        %p296 = pneg %p182
      $region34: #{tpu_custom_call.1} parent=11 // pred_check_branch
        %298 = sbr.rel (%p296) target = $region36
      $region35: #{tpu_custom_call.1} parent=11 // pred_region
        _
      $region36: #{tpu_custom_call.1} parent=11 // pred_fallthru
        _
    $region12: #{tpu_custom_call.1} parent=5 // pred_fallthru
      _
    %p299 = scmp.lt.s32.totalorder %s16, 2
    // Predicated region
    $region37: #{tpu_custom_call.1} parent=5 // pred_check
      %p300 = pneg %p299
    $region38: #{tpu_custom_call.1} parent=5 // pred_check_branch
      %302 = sbr.rel (%p300) target = $region40
    $region39: #{tpu_custom_call.1} parent=5 // pred_region
      // Predicated region
      $region41: #{tpu_custom_call.1} parent=39 // pred_check
        %p303 = pneg %p50
      $region42: #{tpu_custom_call.1} parent=39 // pred_check_branch
        %305 = sbr.rel (%p303) target = $region44
      $region43: #{tpu_custom_call.1} parent=39 // pred_region
        %p306 = scmp.lt.s32.totalorder %s23, 1
        %s307 = scalar_select %p306, %s23, 1
        %p308 = scmp.lt.s32.totalorder %s24, 0
        %s309 = scalar_select %p308, %s24, 0
        %s310 = smul.addr %s307, 8
        %s311 = sadd.s32 %s309, %s310
        %s312 = smul.addr %s311, 8
        %s313 = scalar_lea.vmem %s0, %s312
      $region44: #{tpu_custom_call.1} parent=39 // pred_fallthru
        _
    $region40: #{tpu_custom_call.1} parent=5 // pred_fallthru
      _
    %p314 = scmp.le.s32.totalorder 1, %s16
    %p315 = scmp.lt.s32.totalorder %s16, 3
    %p316 = pnand %p314, %p315
    %p317 = pneg %p316
    // Predicated region
    $region45: #{tpu_custom_call.1} parent=5 // pred_check
      _
    $region46: #{tpu_custom_call.1} parent=5 // pred_check_branch
      %319 = sbr.rel (%p316) target = $region48
    $region47: #{tpu_custom_call.1} parent=5 // pred_region
      %s320 = ssub.s32 %s16, 1
      %p321 = scmp.lt.s32.totalorder %s25, 1
      %s322 = scalar_select %p321, %s25, 1
      %p323 = scmp.lt.s32.totalorder %s26, 0
      %s324 = scalar_select %p323, %s26, 0
      %s325 = smul.addr %s322, 8
      %s326 = sadd.s32 %s324, %s325
      %s327 = smul.addr %s326, 8
      %s328 = scalar_lea.vmem %s0, %s327
      %p329 = pneg %p56
      %p330 = pneg %p53
      %p331 = pneg %p77
      %p332 = pneg %p74
      %p333 = pneg %p98
      %p334 = pneg %p95
      %p335 = pneg %p119
      %p336 = pneg %p116
      %p337 = pneg %p140
      %p338 = pneg %p137
      %p339 = pneg %p161
      %p340 = pneg %p158
      %p341 = pneg %p182
      %p342 = pneg %p179
      %p343 = pneg %p210
      %p344 = pneg %p207
      %p345 = scmp.lt.s32.totalorder %s25, 1
      %s346 = scalar_select %p345, %s25, 1
      %p347 = scmp.lt.s32.totalorder %s26, 0
      %s348 = scalar_select %p347, %s26, 0
      %s349 = smul.addr %s346, 16
      %s350 = sadd.s32 %s348, %s349
      %s351 = smul.addr %s350, 4
      %s352 = scalar_lea.vmem %s7, %s351
      %p353 = pneg %p238
      %p354 = pneg %p235
      %p355 = scmp.lt.s32.totalorder %s25, 1
      %s356 = scalar_select %p355, %s25, 1
      %p357 = scmp.lt.s32.totalorder %s26, 0
      %s358 = scalar_select %p357, %s26, 0
      %s359 = smul.addr %s356, 4
      %s360 = sadd.s32 %s358, %s359
      %s361 = smul.addr %s360, 4
      %s362 = scalar_lea.vmem %s8, %s361
      %p363 = pneg %p266
      %p364 = pneg %p263
      %p365 = scmp.lt.s32.totalorder %s25, 1
      %s366 = scalar_select %p365, %s25, 1
      %p367 = scmp.lt.s32.totalorder %s26, 0
      %s368 = scalar_select %p367, %s26, 0
      %s369 = smul.addr %s366, 14
      %s370 = sadd.s32 %s368, %s369
      %s371 = smul.addr %s370, 4
      %s372 = scalar_lea.vmem %s9, %s371
      %p373 = scmp.lt.s32.totalorder %s25, 1
      %s374 = scalar_select %p373, %s25, 1
      %p375 = scmp.lt.s32.totalorder %s26, 0
      %s376 = scalar_select %p375, %s26, 0
      %s377 = smul.addr %s374, 8
      %s378 = sadd.s32 %s376, %s377
      %s379 = smul.addr %s378, 8
      %s380 = scalar_lea.vmem %s0, %s379
      %p381 = scmp.lt.s32.totalorder %s25, 1
      %s382 = scalar_select %p381, %s25, 1
      %p383 = scmp.lt.s32.totalorder %s26, 0
      %s384 = scalar_select %p383, %s26, 0
      %s385 = smul.addr %s382, 16
      %s386 = sadd.s32 %s384, %s385
      %s387 = smul.addr %s386, 4
      %s388 = scalar_lea.vmem %s7, %s387
      %p389 = scmp.lt.s32.totalorder %s25, 1
      %s390 = scalar_select %p389, %s25, 1
      %p391 = scmp.lt.s32.totalorder %s26, 0
      %s392 = scalar_select %p391, %s26, 0
      %s393 = smul.addr %s390, 4
      %s394 = sadd.s32 %s392, %s393
      %s395 = smul.addr %s394, 4
      %s396 = scalar_lea.vmem %s8, %s395
      %p397 = scmp.lt.s32.totalorder %s25, 1
      %s398 = scalar_select %p397, %s25, 1
      %p399 = scmp.lt.s32.totalorder %s26, 0
      %s400 = scalar_select %p399, %s26, 0
      %s401 = smul.addr %s398, 14
      %s402 = sadd.s32 %s400, %s401
      %s403 = smul.addr %s402, 4
      %s404 = scalar_lea.vmem %s9, %s403
      %v406 = vld [vmem:[%s380] sm:$0xff]
      %v407 = vld [vmem:[%s380 + $0x8] sm:$0xff]
      %v408 = vld [vmem:[%s380 + $0x10] sm:$0xff]
      %v409 = vld [vmem:[%s380 + $0x18] sm:$0xff]
      %v410 = vld [vmem:[%s380 + $0x20] sm:$0xff]
      %v411 = vld [vmem:[%s380 + $0x28] sm:$0xff]
      %v412 = vld [vmem:[%s380 + $0x30] sm:$0xff]
      %v413 = vld [vmem:[%s380 + $0x38] sm:$0xff]
      %v414 = vpack.c.bf16 %v407, %v406
      %v415 = vpack.c.bf16 %v409, %v408
      %v416 = vpack.c.bf16 %v411, %v410
      %v417 = vpack.c.bf16 %v413, %v412
      %v418 = vld [vmem:[%s1] sm:$0xf]
      %v419 = vld [vmem:[%s1 + $0x4] sm:$0xf]
      %v420 = vld [vmem:[%s1 + $0x8] sm:$0xf]
      %v421 = vld [vmem:[%s1 + $0xc] sm:$0xf]
      %v422 = vld [vmem:[%s1 + $0x10] sm:$0xf]
      %v423 = vld [vmem:[%s1 + $0x14] sm:$0xf]
      %v424 = vld [vmem:[%s1 + $0x18] sm:$0xf]
      %v425 = vld [vmem:[%s1 + $0x1c] sm:$0xf]
      %v426 = vld [vmem:[%s1 + $0x20] sm:$0xf]
      %v427 = vld [vmem:[%s1 + $0x24] sm:$0xf]
      %v428 = vld [vmem:[%s1 + $0x28] sm:$0xf]
      %v429 = vld [vmem:[%s1 + $0x2c] sm:$0xf]
      %v430 = vld [vmem:[%s1 + $0x30] sm:$0xf]
      %v431 = vld [vmem:[%s1 + $0x34] sm:$0xf]
      %v432 = vld [vmem:[%s1 + $0x38] sm:$0xf]
      %v433 = vld [vmem:[%s1 + $0x3c] sm:$0xf]
      %v434 = vld [vmem:[%s2] sm:$0xf]
      %v435 = vld [vmem:[%s2 + $0x4] sm:$0xf]
      %v436 = vld [vmem:[%s2 + $0x8] sm:$0xf]
      %v437 = vld [vmem:[%s2 + $0xc] sm:$0xf]
      %v438 = vld [vmem:[%s2 + $0x10] sm:$0xf]
      %v439 = vld [vmem:[%s2 + $0x14] sm:$0xf]
      %v440 = vld [vmem:[%s2 + $0x18] sm:$0xf]
      %v441 = vld [vmem:[%s2 + $0x1c] sm:$0xf]
      %v442 = vld [vmem:[%s2 + $0x20] sm:$0xf]
      %v443 = vld [vmem:[%s2 + $0x24] sm:$0xf]
      %v444 = vld [vmem:[%s2 + $0x28] sm:$0xf]
      %v445 = vld [vmem:[%s2 + $0x2c] sm:$0xf]
      %v446 = vld [vmem:[%s2 + $0x30] sm:$0xf]
      %v447 = vld [vmem:[%s2 + $0x34] sm:$0xf]
      %v448 = vld [vmem:[%s2 + $0x38] sm:$0xf]
      %v449 = vld [vmem:[%s2 + $0x3c] sm:$0xf]
      %v450 = vunpack.c.l.bf16 %v434
      %v451 = vunpack.c.l.bf16 %v435
      %v452 = vunpack.c.l.bf16 %v436
      %v453 = vunpack.c.l.bf16 %v437
      %v454 = vunpack.c.l.bf16 %v438
      %v455 = vunpack.c.l.bf16 %v439
      %v456 = vunpack.c.l.bf16 %v440
      %v457 = vunpack.c.l.bf16 %v441
      %v458 = vunpack.c.l.bf16 %v442
      %v459 = vunpack.c.l.bf16 %v443
      %v460 = vunpack.c.l.bf16 %v444
      %v461 = vunpack.c.l.bf16 %v445
      %v462 = vunpack.c.l.bf16 %v446
      %v463 = vunpack.c.l.bf16 %v447
      %v464 = vunpack.c.l.bf16 %v448
      %v465 = vunpack.c.l.bf16 %v449
      %467 = vset.pattern.permute.xlu0 0
      %468 = vperm.xlu0 %467, %v450
      %v469 = vpop.permute.xlu0 %468
      %472 = vset.pattern.permute.xlu0 0
      %473 = vperm.xlu0 %472, %v451
      %v474 = vpop.permute.xlu0 %473
      %477 = vset.pattern.permute.xlu0 0
      %478 = vperm.xlu0 %477, %v452
      %v479 = vpop.permute.xlu0 %478
      %482 = vset.pattern.permute.xlu0 0
      %483 = vperm.xlu0 %482, %v453
      %v484 = vpop.permute.xlu0 %483
      %487 = vset.pattern.permute.xlu0 0
      %488 = vperm.xlu0 %487, %v454
      %v489 = vpop.permute.xlu0 %488
      %492 = vset.pattern.permute.xlu0 0
      %493 = vperm.xlu0 %492, %v455
      %v494 = vpop.permute.xlu0 %493
      %497 = vset.pattern.permute.xlu0 0
      %498 = vperm.xlu0 %497, %v456
      %v499 = vpop.permute.xlu0 %498
      %502 = vset.pattern.permute.xlu0 0
      %503 = vperm.xlu0 %502, %v457
      %v504 = vpop.permute.xlu0 %503
      %507 = vset.pattern.permute.xlu0 0
      %508 = vperm.xlu0 %507, %v458
      %v509 = vpop.permute.xlu0 %508
      %512 = vset.pattern.permute.xlu0 0
      %513 = vperm.xlu0 %512, %v459
      %v514 = vpop.permute.xlu0 %513
      %517 = vset.pattern.permute.xlu0 0
      %518 = vperm.xlu0 %517, %v460
      %v519 = vpop.permute.xlu0 %518
      %522 = vset.pattern.permute.xlu0 0
      %523 = vperm.xlu0 %522, %v461
      %v524 = vpop.permute.xlu0 %523
      %527 = vset.pattern.permute.xlu0 0
      %528 = vperm.xlu0 %527, %v462
      %v529 = vpop.permute.xlu0 %528
      %532 = vset.pattern.permute.xlu0 0
      %533 = vperm.xlu0 %532, %v463
      %v534 = vpop.permute.xlu0 %533
      %537 = vset.pattern.permute.xlu0 0
      %538 = vperm.xlu0 %537, %v464
      %v539 = vpop.permute.xlu0 %538
      %542 = vset.pattern.permute.xlu0 0
      %543 = vperm.xlu0 %542, %v465
      %v544 = vpop.permute.xlu0 %543
      %v562 = vunpack.c.l.b16 %v418
      %v563 = vunpack.c.l.b16 %v419
      %v564 = vunpack.c.l.b16 %v420
      %v565 = vunpack.c.l.b16 %v421
      %v566 = vunpack.c.l.b16 %v422
      %v567 = vunpack.c.l.b16 %v423
      %v568 = vunpack.c.l.b16 %v424
      %v569 = vunpack.c.l.b16 %v425
      %v570 = vunpack.c.l.b16 %v426
      %v571 = vunpack.c.l.b16 %v427
      %v572 = vunpack.c.l.b16 %v428
      %v573 = vunpack.c.l.b16 %v429
      %v574 = vunpack.c.l.b16 %v430
      %v575 = vunpack.c.l.b16 %v431
      %v576 = vunpack.c.l.b16 %v432
      %v577 = vunpack.c.l.b16 %v433
      %v578 = vpack.c.b16 %v563, %v562
      %v579 = vpack.c.b16 %v565, %v564
      %v580 = vpack.c.b16 %v567, %v566
      %v581 = vpack.c.b16 %v569, %v568
      %v582 = vpack.c.b16 %v571, %v570
      %v583 = vpack.c.b16 %v573, %v572
      %v584 = vpack.c.b16 %v575, %v574
      %v585 = vpack.c.b16 %v577, %v576
      %vm586 = vcmask 523264
      %v588 = vsel %vm586, %v578, 0
      %v591 = vsel %vm586, %v579, 0
      %v594 = vsel %vm586, %v580, 0
      %v597 = vsel %vm586, %v581, 0
      %v600 = vsel %vm586, %v582, 0
      %v603 = vsel %vm586, %v583, 0
      %v606 = vsel %vm586, %v584, 0
      %v609 = vsel %vm586, %v585, 0
      %611 = vmatprep.subr.bf16.mxu0 0
      %612 = vmatpush1.bf16.msra.mxu0 0
      %613 = vmatprep.subr.bf16.mxu0 0
      %614 = vmatpush1.bf16.msra.mxu0 0
      %615 = vmatprep.subr.bf16.mxu0 0
      %616 = vmatpush1.bf16.msra.mxu0 0
      %617 = vmatprep.subr.bf16.mxu0 0
      %618 = vmatpush1.bf16.msra.mxu0 0
      %619 = vmatprep.subr.bf16.mxu0 0
      %620 = vmatpush1.bf16.msra.mxu0 %v417
      %621 = vmatprep.subr.bf16.mxu0 0
      %622 = vmatpush1.bf16.msra.mxu0 %v416
      %623 = vmatprep.subr.bf16.mxu0 0
      %624 = vmatpush1.bf16.msra.mxu0 %v415
      %625 = vmatprep.subr.bf16.mxu0 0
      %626 = vmatpush1.bf16.msra.mxu0 %v414
      %627 = vmatprep.subr.bf16.mxu0 0
      %628 = vmatpush2.bf16.msra.mxu0 0
      %629 = vmatprep.subr.bf16.mxu0 0
      %630 = vmatpush2.bf16.msra.mxu0 0
      %631 = vmatprep.subr.bf16.mxu0 0
      %632 = vmatpush2.bf16.msra.mxu0 0
      %633 = vmatprep.subr.bf16.mxu0 0
      %634 = vmatpush2.bf16.msra.mxu0 0
      %635 = vmatprep.subr.bf16.mxu0 0
      %636 = vmatpush2.bf16.msra.mxu0 0
      %637 = vmatprep.subr.bf16.mxu0 0
      %638 = vmatpush2.bf16.msra.mxu0 0
      %639 = vmatprep.subr.bf16.mxu0 0
      %640 = vmatpush2.bf16.msra.mxu0 0
      %641 = vmatprep.subr.bf16.mxu0 0
      %642 = vmatpush2.bf16.msra.mxu0 0
      %643 = vmatprep.mubr.bf16.mxu0 0
      %644 = vmatmul.mubr.bf16.gmra.mxu0 %v588
      %v645 = vpop.f32.mrf.mxu0
      %v646 = vadd.f32 %v469, %v645
      %v647 = vpop.f32.mrf.mxu0
      %v648 = vpop.f32.mrf.mxu0
      %v649 = vadd.f32 %v474, %v648
      %v650 = vpop.f32.mrf.mxu0
      %651 = vmatprep.mubr.bf16.mxu0 0
      %652 = vmatmul.mubr.bf16.gmra.mxu0 %v591
      %v653 = vpop.f32.mrf.mxu0
      %v654 = vadd.f32 %v479, %v653
      %v655 = vpop.f32.mrf.mxu0
      %v656 = vpop.f32.mrf.mxu0
      %v657 = vadd.f32 %v484, %v656
      %v658 = vpop.f32.mrf.mxu0
      %659 = vmatprep.mubr.bf16.mxu0 0
      %660 = vmatmul.mubr.bf16.gmra.mxu0 %v594
      %v661 = vpop.f32.mrf.mxu0
      %v662 = vadd.f32 %v489, %v661
      %v663 = vpop.f32.mrf.mxu0
      %v664 = vpop.f32.mrf.mxu0
      %v665 = vadd.f32 %v494, %v664
      %v666 = vpop.f32.mrf.mxu0
      %667 = vmatprep.mubr.bf16.mxu0 0
      %668 = vmatmul.mubr.bf16.gmra.mxu0 %v597
      %v669 = vpop.f32.mrf.mxu0
      %v670 = vadd.f32 %v499, %v669
      %v671 = vpop.f32.mrf.mxu0
      %v672 = vpop.f32.mrf.mxu0
      %v673 = vadd.f32 %v504, %v672
      %v674 = vpop.f32.mrf.mxu0
      %675 = vmatprep.mubr.bf16.mxu0 0
      %676 = vmatmul.mubr.bf16.gmra.mxu0 %v600
      %v677 = vpop.f32.mrf.mxu0
      %v678 = vadd.f32 %v509, %v677
      %v679 = vpop.f32.mrf.mxu0
      %v680 = vpop.f32.mrf.mxu0
      %v681 = vadd.f32 %v514, %v680
      %v682 = vpop.f32.mrf.mxu0
      %683 = vmatprep.mubr.bf16.mxu0 0
      %684 = vmatmul.mubr.bf16.gmra.mxu0 %v603
      %v685 = vpop.f32.mrf.mxu0
      %v686 = vadd.f32 %v519, %v685
      %v687 = vpop.f32.mrf.mxu0
      %v688 = vpop.f32.mrf.mxu0
      %v689 = vadd.f32 %v524, %v688
      %v690 = vpop.f32.mrf.mxu0
      %691 = vmatprep.mubr.bf16.mxu0 0
      %692 = vmatmul.mubr.bf16.gmra.mxu0 %v606
      %v693 = vpop.f32.mrf.mxu0
      %v694 = vadd.f32 %v529, %v693
      %v695 = vpop.f32.mrf.mxu0
      %v696 = vpop.f32.mrf.mxu0
      %v697 = vadd.f32 %v534, %v696
      %v698 = vpop.f32.mrf.mxu0
      %699 = vmatprep.mubr.bf16.mxu0 0
      %700 = vmatmul.mubr.bf16.gmra.mxu0 %v609
      %v701 = vpop.f32.mrf.mxu0
      %v702 = vadd.f32 %v539, %v701
      %v703 = vpop.f32.mrf.mxu0
      %v704 = vpop.f32.mrf.mxu0
      %v705 = vadd.f32 %v544, %v704
      %v706 = vpop.f32.mrf.mxu0
      %707 = vdwg.mxu0
      %v708 = vpack.c.bf16 %v649, %v646
      %v709 = vpack.c.bf16 %v657, %v654
      %v710 = vpack.c.bf16 %v665, %v662
      %v711 = vpack.c.bf16 %v673, %v670
      %v712 = vpack.c.bf16 %v681, %v678
      %v713 = vpack.c.bf16 %v689, %v686
      %v714 = vpack.c.bf16 %v697, %v694
      %v715 = vpack.c.bf16 %v705, %v702
      %v724 = vunpack.c.l.b16 %v708
      %v725 = vunpack.c.h.b16 %v708
      %v726 = vunpack.c.l.b16 %v709
      %v727 = vunpack.c.h.b16 %v709
      %v728 = vunpack.c.l.b16 %v710
      %v729 = vunpack.c.h.b16 %v710
      %v730 = vunpack.c.l.b16 %v711
      %v731 = vunpack.c.h.b16 %v711
      %v732 = vunpack.c.l.b16 %v712
      %v733 = vunpack.c.h.b16 %v712
      %v734 = vunpack.c.l.b16 %v713
      %v735 = vunpack.c.h.b16 %v713
      %v736 = vunpack.c.l.b16 %v714
      %v737 = vunpack.c.h.b16 %v714
      %v738 = vunpack.c.l.b16 %v715
      %v739 = vunpack.c.h.b16 %v715
      %v740 = vpack.c.b16 %v724, %v724
      %v741 = vpack.c.b16 %v725, %v725
      %v742 = vpack.c.b16 %v726, %v726
      %v743 = vpack.c.b16 %v727, %v727
      %v744 = vpack.c.b16 %v728, %v728
      %v745 = vpack.c.b16 %v729, %v729
      %v746 = vpack.c.b16 %v730, %v730
      %v747 = vpack.c.b16 %v731, %v731
      %v748 = vpack.c.b16 %v732, %v732
      %v749 = vpack.c.b16 %v733, %v733
      %v750 = vpack.c.b16 %v734, %v734
      %v751 = vpack.c.b16 %v735, %v735
      %v752 = vpack.c.b16 %v736, %v736
      %v753 = vpack.c.b16 %v737, %v737
      %v754 = vpack.c.b16 %v738, %v738
      %v755 = vpack.c.b16 %v739, %v739
      %vm772 = vcmask 60416
      %773 = vst.msk [vmem:[%s388] sm:$0xf] %vm772, %v740
      %774 = vst.msk [vmem:[%s388 + $0x4] sm:$0xf] %vm772, %v741
      %775 = vst.msk [vmem:[%s388 + $0x8] sm:$0xf] %vm772, %v742
      %776 = vst.msk [vmem:[%s388 + $0xc] sm:$0xf] %vm772, %v743
      %777 = vst.msk [vmem:[%s388 + $0x10] sm:$0xf] %vm772, %v744
      %778 = vst.msk [vmem:[%s388 + $0x14] sm:$0xf] %vm772, %v745
      %779 = vst.msk [vmem:[%s388 + $0x18] sm:$0xf] %vm772, %v746
      %780 = vst.msk [vmem:[%s388 + $0x1c] sm:$0xf] %vm772, %v747
      %781 = vst.msk [vmem:[%s388 + $0x20] sm:$0xf] %vm772, %v748
      %782 = vst.msk [vmem:[%s388 + $0x24] sm:$0xf] %vm772, %v749
      %783 = vst.msk [vmem:[%s388 + $0x28] sm:$0xf] %vm772, %v750
      %784 = vst.msk [vmem:[%s388 + $0x2c] sm:$0xf] %vm772, %v751
      %785 = vst.msk [vmem:[%s388 + $0x30] sm:$0xf] %vm772, %v752
      %786 = vst.msk [vmem:[%s388 + $0x34] sm:$0xf] %vm772, %v753
      %787 = vst.msk [vmem:[%s388 + $0x38] sm:$0xf] %vm772, %v754
      %788 = vst.msk [vmem:[%s388 + $0x3c] sm:$0xf] %vm772, %v755
      %v789 = vld [vmem:[%s3] sm:$0xf]
      %v790 = vld [vmem:[%s3 + $0x4] sm:$0xf]
      %v791 = vld [vmem:[%s3 + $0x8] sm:$0xf]
      %v792 = vld [vmem:[%s3 + $0xc] sm:$0xf]
      %v793 = vld [vmem:[%s4] sm:$0xf]
      %v794 = vld [vmem:[%s4 + $0x4] sm:$0xf]
      %v795 = vld [vmem:[%s4 + $0x8] sm:$0xf]
      %v796 = vld [vmem:[%s4 + $0xc] sm:$0xf]
      %v797 = vunpack.c.l.bf16 %v793
      %v798 = vunpack.c.l.bf16 %v794
      %v799 = vunpack.c.l.bf16 %v795
      %v800 = vunpack.c.l.bf16 %v796
      %802 = vset.pattern.permute.xlu0 0
      %803 = vperm.xlu0 %802, %v797
      %v804 = vpop.permute.xlu0 %803
      %807 = vset.pattern.permute.xlu0 0
      %808 = vperm.xlu0 %807, %v798
      %v809 = vpop.permute.xlu0 %808
      %812 = vset.pattern.permute.xlu0 0
      %813 = vperm.xlu0 %812, %v799
      %v814 = vpop.permute.xlu0 %813
      %817 = vset.pattern.permute.xlu0 0
      %818 = vperm.xlu0 %817, %v800
      %v819 = vpop.permute.xlu0 %818
      %v825 = vunpack.c.l.b16 %v789
      %v826 = vunpack.c.l.b16 %v790
      %v827 = vunpack.c.l.b16 %v791
      %v828 = vunpack.c.l.b16 %v792
      %v829 = vpack.c.b16 %v826, %v825
      %v830 = vpack.c.b16 %v828, %v827
      %833 = vmatprep.subr.bf16.mxu0 0
      %834 = vmatpush1.bf16.msra.mxu0 %v715
      %835 = vmatprep.subr.bf16.mxu0 0
      %836 = vmatpush1.bf16.msra.mxu0 %v714
      %837 = vmatprep.subr.bf16.mxu0 0
      %838 = vmatpush1.bf16.msra.mxu0 %v713
      %839 = vmatprep.subr.bf16.mxu0 0
      %840 = vmatpush1.bf16.msra.mxu0 %v712
      %841 = vmatprep.subr.bf16.mxu0 0
      %842 = vmatpush1.bf16.msra.mxu0 %v711
      %843 = vmatprep.subr.bf16.mxu0 0
      %844 = vmatpush1.bf16.msra.mxu0 %v710
      %845 = vmatprep.subr.bf16.mxu0 0
      %846 = vmatpush1.bf16.msra.mxu0 %v709
      %847 = vmatprep.subr.bf16.mxu0 0
      %848 = vmatpush1.bf16.msra.mxu0 %v708
      %849 = vmatprep.subr.bf16.mxu0 0
      %850 = vmatpush2.bf16.msra.mxu0 0
      %851 = vmatprep.subr.bf16.mxu0 0
      %852 = vmatpush2.bf16.msra.mxu0 0
      %853 = vmatprep.subr.bf16.mxu0 0
      %854 = vmatpush2.bf16.msra.mxu0 0
      %855 = vmatprep.subr.bf16.mxu0 0
      %856 = vmatpush2.bf16.msra.mxu0 0
      %857 = vmatprep.subr.bf16.mxu0 0
      %858 = vmatpush2.bf16.msra.mxu0 0
      %859 = vmatprep.subr.bf16.mxu0 0
      %860 = vmatpush2.bf16.msra.mxu0 0
      %861 = vmatprep.subr.bf16.mxu0 0
      %862 = vmatpush2.bf16.msra.mxu0 0
      %863 = vmatprep.subr.bf16.mxu0 0
      %864 = vmatpush2.bf16.msra.mxu0 0
      %865 = vmatprep.mubr.bf16.mxu0 0
      %866 = vmatmul.mubr.bf16.gmra.mxu0 %v829
      %v867 = vpop.f32.mrf.mxu0
      %v868 = vadd.f32 %v804, %v867
      %v869 = vpop.f32.mrf.mxu0
      %v870 = vpop.f32.mrf.mxu0
      %v871 = vadd.f32 %v809, %v870
      %v872 = vpop.f32.mrf.mxu0
      %873 = vmatprep.mubr.bf16.mxu0 0
      %874 = vmatmul.mubr.bf16.gmra.mxu0 %v830
      %v875 = vpop.f32.mrf.mxu0
      %v876 = vadd.f32 %v814, %v875
      %v877 = vpop.f32.mrf.mxu0
      %v878 = vpop.f32.mrf.mxu0
      %v879 = vadd.f32 %v819, %v878
      %v880 = vpop.f32.mrf.mxu0
      %881 = vdwg.mxu0
      %v882 = vpack.c.bf16 %v871, %v868
      %v883 = vpack.c.bf16 %v879, %v876
      %v886 = vunpack.c.l.b16 %v882
      %v887 = vunpack.c.h.b16 %v882
      %v888 = vunpack.c.l.b16 %v883
      %v889 = vunpack.c.h.b16 %v883
      %v890 = vpack.c.b16 %v886, %v886
      %v891 = vpack.c.b16 %v887, %v887
      %v892 = vpack.c.b16 %v888, %v888
      %v893 = vpack.c.b16 %v889, %v889
      %898 = vst.msk [vmem:[%s396] sm:$0xf] %vm772, %v890
      %899 = vst.msk [vmem:[%s396 + $0x4] sm:$0xf] %vm772, %v891
      %900 = vst.msk [vmem:[%s396 + $0x8] sm:$0xf] %vm772, %v892
      %901 = vst.msk [vmem:[%s396 + $0xc] sm:$0xf] %vm772, %v893
      %v902 = vld [vmem:[%s5] sm:$0xf]
      %v903 = vld [vmem:[%s5 + $0x4] sm:$0xf]
      %v904 = vld [vmem:[%s5 + $0x8] sm:$0xf]
      %v905 = vld [vmem:[%s5 + $0xc] sm:$0xf]
      %v906 = vld [vmem:[%s5 + $0x10] sm:$0xf]
      %v907 = vld [vmem:[%s5 + $0x14] sm:$0xf]
      %v908 = vld [vmem:[%s5 + $0x18] sm:$0xf]
      %v909 = vld [vmem:[%s5 + $0x1c] sm:$0xf]
      %v910 = vld [vmem:[%s5 + $0x20] sm:$0xf]
      %v911 = vld [vmem:[%s5 + $0x24] sm:$0xf]
      %v912 = vld [vmem:[%s5 + $0x28] sm:$0xf]
      %v913 = vld [vmem:[%s5 + $0x2c] sm:$0xf]
      %v914 = vld [vmem:[%s5 + $0x30] sm:$0xf]
      %v915 = vld [vmem:[%s5 + $0x34] sm:$0xf]
      %v916 = vld [vmem:[%s6] sm:$0xf]
      %v917 = vld [vmem:[%s6 + $0x4] sm:$0xf]
      %v918 = vld [vmem:[%s6 + $0x8] sm:$0xf]
      %v919 = vld [vmem:[%s6 + $0xc] sm:$0xf]
      %v920 = vld [vmem:[%s6 + $0x10] sm:$0xf]
      %v921 = vld [vmem:[%s6 + $0x14] sm:$0xf]
      %v922 = vld [vmem:[%s6 + $0x18] sm:$0xf]
      %v923 = vld [vmem:[%s6 + $0x1c] sm:$0xf]
      %v924 = vld [vmem:[%s6 + $0x20] sm:$0xf]
      %v925 = vld [vmem:[%s6 + $0x24] sm:$0xf]
      %v926 = vld [vmem:[%s6 + $0x28] sm:$0xf]
      %v927 = vld [vmem:[%s6 + $0x2c] sm:$0xf]
      %v928 = vld [vmem:[%s6 + $0x30] sm:$0xf]
      %v929 = vld [vmem:[%s6 + $0x34] sm:$0xf]
      %v930 = vunpack.c.l.bf16 %v916
      %v931 = vunpack.c.l.bf16 %v917
      %v932 = vunpack.c.l.bf16 %v918
      %v933 = vunpack.c.l.bf16 %v919
      %v934 = vunpack.c.l.bf16 %v920
      %v935 = vunpack.c.l.bf16 %v921
      %v936 = vunpack.c.l.bf16 %v922
      %v937 = vunpack.c.l.bf16 %v923
      %v938 = vunpack.c.l.bf16 %v924
      %v939 = vunpack.c.l.bf16 %v925
      %v940 = vunpack.c.l.bf16 %v926
      %v941 = vunpack.c.l.bf16 %v927
      %v942 = vunpack.c.l.bf16 %v928
      %v943 = vunpack.c.l.bf16 %v929
      %945 = vset.pattern.permute.xlu0 0
      %946 = vperm.xlu0 %945, %v930
      %v947 = vpop.permute.xlu0 %946
      %950 = vset.pattern.permute.xlu0 0
      %951 = vperm.xlu0 %950, %v931
      %v952 = vpop.permute.xlu0 %951
      %955 = vset.pattern.permute.xlu0 0
      %956 = vperm.xlu0 %955, %v932
      %v957 = vpop.permute.xlu0 %956
      %960 = vset.pattern.permute.xlu0 0
      %961 = vperm.xlu0 %960, %v933
      %v962 = vpop.permute.xlu0 %961
      %965 = vset.pattern.permute.xlu0 0
      %966 = vperm.xlu0 %965, %v934
      %v967 = vpop.permute.xlu0 %966
      %970 = vset.pattern.permute.xlu0 0
      %971 = vperm.xlu0 %970, %v935
      %v972 = vpop.permute.xlu0 %971
      %975 = vset.pattern.permute.xlu0 0
      %976 = vperm.xlu0 %975, %v936
      %v977 = vpop.permute.xlu0 %976
      %980 = vset.pattern.permute.xlu0 0
      %981 = vperm.xlu0 %980, %v937
      %v982 = vpop.permute.xlu0 %981
      %985 = vset.pattern.permute.xlu0 0
      %986 = vperm.xlu0 %985, %v938
      %v987 = vpop.permute.xlu0 %986
      %990 = vset.pattern.permute.xlu0 0
      %991 = vperm.xlu0 %990, %v939
      %v992 = vpop.permute.xlu0 %991
      %995 = vset.pattern.permute.xlu0 0
      %996 = vperm.xlu0 %995, %v940
      %v997 = vpop.permute.xlu0 %996
      %1000 = vset.pattern.permute.xlu0 0
      %1001 = vperm.xlu0 %1000, %v941
      %v1002 = vpop.permute.xlu0 %1001
      %1005 = vset.pattern.permute.xlu0 0
      %1006 = vperm.xlu0 %1005, %v942
      %v1007 = vpop.permute.xlu0 %1006
      %1010 = vset.pattern.permute.xlu0 0
      %1011 = vperm.xlu0 %1010, %v943
      %v1012 = vpop.permute.xlu0 %1011
      %v1028 = vunpack.c.l.b16 %v902
      %v1029 = vunpack.c.l.b16 %v903
      %v1030 = vunpack.c.l.b16 %v904
      %v1031 = vunpack.c.l.b16 %v905
      %v1032 = vunpack.c.l.b16 %v906
      %v1033 = vunpack.c.l.b16 %v907
      %v1034 = vunpack.c.l.b16 %v908
      %v1035 = vunpack.c.l.b16 %v909
      %v1036 = vunpack.c.l.b16 %v910
      %v1037 = vunpack.c.l.b16 %v911
      %v1038 = vunpack.c.l.b16 %v912
      %v1039 = vunpack.c.l.b16 %v913
      %v1040 = vunpack.c.l.b16 %v914
      %v1041 = vunpack.c.l.b16 %v915
      %v1042 = vpack.c.b16 %v1029, %v1028
      %v1043 = vpack.c.b16 %v1031, %v1030
      %v1044 = vpack.c.b16 %v1033, %v1032
      %v1045 = vpack.c.b16 %v1035, %v1034
      %v1046 = vpack.c.b16 %v1037, %v1036
      %v1047 = vpack.c.b16 %v1039, %v1038
      %v1048 = vpack.c.b16 %v1041, %v1040
      %vm1049 = vcmask 261120
      %v1051 = vsel %vm1049, %v1042, 0
      %v1054 = vsel %vm1049, %v1043, 0
      %v1057 = vsel %vm1049, %v1044, 0
      %v1060 = vsel %vm1049, %v1045, 0
      %v1063 = vsel %vm1049, %v1046, 0
      %v1066 = vsel %vm1049, %v1047, 0
      %v1069 = vsel %vm1049, %v1048, 0
      %1071 = vmatprep.subr.bf16.mxu0 0
      %1072 = vmatpush1.bf16.msra.mxu0 0
      %1073 = vmatprep.subr.bf16.mxu0 0
      %1074 = vmatpush1.bf16.msra.mxu0 0
      %1075 = vmatprep.subr.bf16.mxu0 0
      %1076 = vmatpush1.bf16.msra.mxu0 0
      %1077 = vmatprep.subr.bf16.mxu0 0
      %1078 = vmatpush1.bf16.msra.mxu0 0
      %1079 = vmatprep.subr.bf16.mxu0 0
      %1080 = vmatpush1.bf16.msra.mxu0 0
      %1081 = vmatprep.subr.bf16.mxu0 0
      %1082 = vmatpush1.bf16.msra.mxu0 0
      %1083 = vmatprep.subr.bf16.mxu0 0
      %1084 = vmatpush1.bf16.msra.mxu0 %v883
      %1085 = vmatprep.subr.bf16.mxu0 0
      %1086 = vmatpush1.bf16.msra.mxu0 %v882
      %1087 = vmatprep.subr.bf16.mxu0 0
      %1088 = vmatpush2.bf16.msra.mxu0 0
      %1089 = vmatprep.subr.bf16.mxu0 0
      %1090 = vmatpush2.bf16.msra.mxu0 0
      %1091 = vmatprep.subr.bf16.mxu0 0
      %1092 = vmatpush2.bf16.msra.mxu0 0
      %1093 = vmatprep.subr.bf16.mxu0 0
      %1094 = vmatpush2.bf16.msra.mxu0 0
      %1095 = vmatprep.subr.bf16.mxu0 0
      %1096 = vmatpush2.bf16.msra.mxu0 0
      %1097 = vmatprep.subr.bf16.mxu0 0
      %1098 = vmatpush2.bf16.msra.mxu0 0
      %1099 = vmatprep.subr.bf16.mxu0 0
      %1100 = vmatpush2.bf16.msra.mxu0 0
      %1101 = vmatprep.subr.bf16.mxu0 0
      %1102 = vmatpush2.bf16.msra.mxu0 0
      %1103 = vmatprep.mubr.bf16.mxu0 0
      %1104 = vmatmul.mubr.bf16.gmra.mxu0 %v1051
      %v1105 = vpop.f32.mrf.mxu0
      %v1106 = vadd.f32 %v947, %v1105
      %v1107 = vpop.f32.mrf.mxu0
      %v1108 = vpop.f32.mrf.mxu0
      %v1109 = vadd.f32 %v952, %v1108
      %v1110 = vpop.f32.mrf.mxu0
      %1111 = vmatprep.mubr.bf16.mxu0 0
      %1112 = vmatmul.mubr.bf16.gmra.mxu0 %v1054
      %v1113 = vpop.f32.mrf.mxu0
      %v1114 = vadd.f32 %v957, %v1113
      %v1115 = vpop.f32.mrf.mxu0
      %v1116 = vpop.f32.mrf.mxu0
      %v1117 = vadd.f32 %v962, %v1116
      %v1118 = vpop.f32.mrf.mxu0
      %1119 = vmatprep.mubr.bf16.mxu0 0
      %1120 = vmatmul.mubr.bf16.gmra.mxu0 %v1057
      %v1121 = vpop.f32.mrf.mxu0
      %v1122 = vadd.f32 %v967, %v1121
      %v1123 = vpop.f32.mrf.mxu0
      %v1124 = vpop.f32.mrf.mxu0
      %v1125 = vadd.f32 %v972, %v1124
      %v1126 = vpop.f32.mrf.mxu0
      %1127 = vmatprep.mubr.bf16.mxu0 0
      %1128 = vmatmul.mubr.bf16.gmra.mxu0 %v1060
      %v1129 = vpop.f32.mrf.mxu0
      %v1130 = vadd.f32 %v977, %v1129
      %v1131 = vpop.f32.mrf.mxu0
      %v1132 = vpop.f32.mrf.mxu0
      %v1133 = vadd.f32 %v982, %v1132
      %v1134 = vpop.f32.mrf.mxu0
      %1135 = vmatprep.mubr.bf16.mxu0 0
      %1136 = vmatmul.mubr.bf16.gmra.mxu0 %v1063
      %v1137 = vpop.f32.mrf.mxu0
      %v1138 = vadd.f32 %v987, %v1137
      %v1139 = vpop.f32.mrf.mxu0
      %v1140 = vpop.f32.mrf.mxu0
      %v1141 = vadd.f32 %v992, %v1140
      %v1142 = vpop.f32.mrf.mxu0
      %1143 = vmatprep.mubr.bf16.mxu0 0
      %1144 = vmatmul.mubr.bf16.gmra.mxu0 %v1066
      %v1145 = vpop.f32.mrf.mxu0
      %v1146 = vadd.f32 %v997, %v1145
      %v1147 = vpop.f32.mrf.mxu0
      %v1148 = vpop.f32.mrf.mxu0
      %v1149 = vadd.f32 %v1002, %v1148
      %v1150 = vpop.f32.mrf.mxu0
      %1151 = vmatprep.mubr.bf16.mxu0 0
      %1152 = vmatmul.mubr.bf16.gmra.mxu0 %v1069
      %v1153 = vpop.f32.mrf.mxu0
      %v1154 = vadd.f32 %v1007, %v1153
      %v1155 = vpop.f32.mrf.mxu0
      %v1156 = vpop.f32.mrf.mxu0
      %v1157 = vadd.f32 %v1012, %v1156
      %v1158 = vpop.f32.mrf.mxu0
      %1159 = vdwg.mxu0
      %v1160 = vpack.c.bf16 %v1109, %v1106
      %v1161 = vpack.c.bf16 %v1117, %v1114
      %v1162 = vpack.c.bf16 %v1125, %v1122
      %v1163 = vpack.c.bf16 %v1133, %v1130
      %v1164 = vpack.c.bf16 %v1141, %v1138
      %v1165 = vpack.c.bf16 %v1149, %v1146
      %v1166 = vpack.c.bf16 %v1157, %v1154
      %v1174 = vunpack.c.l.b16 %v1160
      %v1175 = vunpack.c.h.b16 %v1160
      %v1176 = vunpack.c.l.b16 %v1161
      %v1177 = vunpack.c.h.b16 %v1161
      %v1178 = vunpack.c.l.b16 %v1162
      %v1179 = vunpack.c.h.b16 %v1162
      %v1180 = vunpack.c.l.b16 %v1163
      %v1181 = vunpack.c.h.b16 %v1163
      %v1182 = vunpack.c.l.b16 %v1164
      %v1183 = vunpack.c.h.b16 %v1164
      %v1184 = vunpack.c.l.b16 %v1165
      %v1185 = vunpack.c.h.b16 %v1165
      %v1186 = vunpack.c.l.b16 %v1166
      %v1187 = vunpack.c.h.b16 %v1166
      %v1188 = vpack.c.b16 %v1174, %v1174
      %v1189 = vpack.c.b16 %v1175, %v1175
      %v1190 = vpack.c.b16 %v1176, %v1176
      %v1191 = vpack.c.b16 %v1177, %v1177
      %v1192 = vpack.c.b16 %v1178, %v1178
      %v1193 = vpack.c.b16 %v1179, %v1179
      %v1194 = vpack.c.b16 %v1180, %v1180
      %v1195 = vpack.c.b16 %v1181, %v1181
      %v1196 = vpack.c.b16 %v1182, %v1182
      %v1197 = vpack.c.b16 %v1183, %v1183
      %v1198 = vpack.c.b16 %v1184, %v1184
      %v1199 = vpack.c.b16 %v1185, %v1185
      %v1200 = vpack.c.b16 %v1186, %v1186
      %v1201 = vpack.c.b16 %v1187, %v1187
      %1216 = vst.msk [vmem:[%s404] sm:$0xf] %vm772, %v1188
      %1217 = vst.msk [vmem:[%s404 + $0x4] sm:$0xf] %vm772, %v1189
      %1218 = vst.msk [vmem:[%s404 + $0x8] sm:$0xf] %vm772, %v1190
      %1219 = vst.msk [vmem:[%s404 + $0xc] sm:$0xf] %vm772, %v1191
      %1220 = vst.msk [vmem:[%s404 + $0x10] sm:$0xf] %vm772, %v1192
      %1221 = vst.msk [vmem:[%s404 + $0x14] sm:$0xf] %vm772, %v1193
      %1222 = vst.msk [vmem:[%s404 + $0x18] sm:$0xf] %vm772, %v1194
      %1223 = vst.msk [vmem:[%s404 + $0x1c] sm:$0xf] %vm772, %v1195
      %1224 = vst.msk [vmem:[%s404 + $0x20] sm:$0xf] %vm772, %v1196
      %1225 = vst.msk [vmem:[%s404 + $0x24] sm:$0xf] %vm772, %v1197
      %1226 = vst.msk [vmem:[%s404 + $0x28] sm:$0xf] %vm772, %v1198
      %1227 = vst.msk [vmem:[%s404 + $0x2c] sm:$0xf] %vm772, %v1199
      %1228 = vst.msk [vmem:[%s404 + $0x30] sm:$0xf] %vm772, %v1200
      %1229 = vst.msk [vmem:[%s404 + $0x34] sm:$0xf] %vm772, %v1201
      %p1230 = scmp.lt.s32.totalorder %s25, 1
      %s1231 = scalar_select %p1230, %s25, 1
      %p1232 = scmp.lt.s32.totalorder %s26, 0
      %s1233 = scalar_select %p1232, %s26, 0
      %s1234 = smul.addr %s1231, 16
      %s1235 = sadd.s32 %s1233, %s1234
      %s1236 = smul.addr %s1235, 4
      %s1237 = scalar_lea.vmem %s7, %s1236
      %p1238 = scmp.lt.s32.totalorder %s25, 1
      %s1239 = scalar_select %p1238, %s25, 1
      %p1240 = scmp.lt.s32.totalorder %s26, 0
      %s1241 = scalar_select %p1240, %s26, 0
      %s1242 = smul.addr %s1239, 4
      %s1243 = sadd.s32 %s1241, %s1242
      %s1244 = smul.addr %s1243, 4
      %s1245 = scalar_lea.vmem %s8, %s1244
      %p1246 = scmp.lt.s32.totalorder %s25, 1
      %s1247 = scalar_select %p1246, %s25, 1
      %p1248 = scmp.lt.s32.totalorder %s26, 0
      %s1249 = scalar_select %p1248, %s26, 0
      %s1250 = smul.addr %s1247, 14
      %s1251 = sadd.s32 %s1249, %s1250
      %s1252 = smul.addr %s1251, 4
      %s1253 = scalar_lea.vmem %s9, %s1252
      // Predicated region
      $region49: #{tpu_custom_call.1} parent=47 // pred_check
        %p1254 = pneg %p207
      $region50: #{tpu_custom_call.1} parent=47 // pred_check_branch
        %1256 = sbr.rel (%p1254) target = $region52
      $region51: #{tpu_custom_call.1} parent=47 // pred_region
        _
      $region52: #{tpu_custom_call.1} parent=47 // pred_fallthru
        _
      // Predicated region
      $region53: #{tpu_custom_call.1} parent=47 // pred_check
        %p1257 = pneg %p235
      $region54: #{tpu_custom_call.1} parent=47 // pred_check_branch
        %1259 = sbr.rel (%p1257) target = $region56
      $region55: #{tpu_custom_call.1} parent=47 // pred_region
        _
      $region56: #{tpu_custom_call.1} parent=47 // pred_fallthru
        _
      // Predicated region
      $region57: #{tpu_custom_call.1} parent=47 // pred_check
        %p1260 = pneg %p263
      $region58: #{tpu_custom_call.1} parent=47 // pred_check_branch
        %1262 = sbr.rel (%p1260) target = $region60
      $region59: #{tpu_custom_call.1} parent=47 // pred_region
        _
      $region60: #{tpu_custom_call.1} parent=47 // pred_fallthru
        _
    $region48: #{tpu_custom_call.1} parent=5 // pred_fallthru
      _
    %p1263 = scmp.le.s32.totalorder 2, %s16
    // Predicated region
    $region61: #{tpu_custom_call.1} parent=5 // pred_check
      %p1264 = pneg %p1263
    $region62: #{tpu_custom_call.1} parent=5 // pred_check_branch
      %1266 = sbr.rel (%p1264) target = $region64
    $region63: #{tpu_custom_call.1} parent=5 // pred_region
      %s1267 = ssub.s32 %s16, 2
      // Predicated region
      $region65: #{tpu_custom_call.1} parent=63 // pred_check
        %p1268 = pneg %p213
      $region66: #{tpu_custom_call.1} parent=63 // pred_check_branch
        %1270 = sbr.rel (%p1268) target = $region68
      $region67: #{tpu_custom_call.1} parent=63 // pred_region
        %p1271 = scmp.lt.s32.totalorder %s27, 1
        %s1272 = scalar_select %p1271, %s27, 1
        %p1273 = scmp.lt.s32.totalorder %s28, 0
        %s1274 = scalar_select %p1273, %s28, 0
        %s1275 = smul.addr %s1272, 16
        %s1276 = sadd.s32 %s1274, %s1275
        %s1277 = smul.addr %s1276, 4
        %s1278 = scalar_lea.vmem %s7, %s1277
      $region68: #{tpu_custom_call.1} parent=63 // pred_fallthru
        _
      // Predicated region
      $region69: #{tpu_custom_call.1} parent=63 // pred_check
        %p1279 = pneg %p241
      $region70: #{tpu_custom_call.1} parent=63 // pred_check_branch
        %1281 = sbr.rel (%p1279) target = $region72
      $region71: #{tpu_custom_call.1} parent=63 // pred_region
        %p1282 = scmp.lt.s32.totalorder %s27, 1
        %s1283 = scalar_select %p1282, %s27, 1
        %p1284 = scmp.lt.s32.totalorder %s28, 0
        %s1285 = scalar_select %p1284, %s28, 0
        %s1286 = smul.addr %s1283, 4
        %s1287 = sadd.s32 %s1285, %s1286
        %s1288 = smul.addr %s1287, 4
        %s1289 = scalar_lea.vmem %s8, %s1288
      $region72: #{tpu_custom_call.1} parent=63 // pred_fallthru
        _
      // Predicated region
      $region73: #{tpu_custom_call.1} parent=63 // pred_check
        %p1290 = pneg %p269
      $region74: #{tpu_custom_call.1} parent=63 // pred_check_branch
        %1292 = sbr.rel (%p1290) target = $region76
      $region75: #{tpu_custom_call.1} parent=63 // pred_region
        %p1293 = scmp.lt.s32.totalorder %s27, 1
        %s1294 = scalar_select %p1293, %s27, 1
        %p1295 = scmp.lt.s32.totalorder %s28, 0
        %s1296 = scalar_select %p1295, %s28, 0
        %s1297 = smul.addr %s1294, 14
        %s1298 = sadd.s32 %s1296, %s1297
        %s1299 = smul.addr %s1298, 4
        %s1300 = scalar_lea.vmem %s9, %s1299
      $region76: #{tpu_custom_call.1} parent=63 // pred_fallthru
        _
    $region64: #{tpu_custom_call.1} parent=5 // pred_fallthru
      _
  $region6: #{tpu_custom_call.1} parent=0 // loop_footer
    %s20 = sadd.s32 1, %s16
  $region7: #{tpu_custom_call.1} parent=0 // loop_footer_branch
    %15 = sbr.rel target = $region3
  $region8: #{tpu_custom_call.1} parent=0 // loop_exit
    _

// kernel: tpu_custom_call.1
$region0: #{tpu_custom_call.1}
  #allocation0 [shape = 'u32[]', space=smem, size = 0x4, offset = 0x4, fixed_abs, tag = 'smem constant byte address 0x4 - core index']
  #allocation1 [shape = 'u32[144,128]{1,0:T(1,128)}', space=vmem, size = 0x12000, scoped, tag = 'internal scratch']
  %s0 = inlined_call_operand.vmem [shape: f32[2,64,8], index: 0, kind: input, shape index: {}]
  %s1 = inlined_call_operand.vmem [shape: bf16[128,64], index: 1, kind: input, shape index: {}]
  %s2 = inlined_call_operand.vmem [shape: bf16[128,1], index: 2, kind: input, shape index: {}]
  %s3 = inlined_call_operand.vmem [shape: bf16[32,128], index: 3, kind: input, shape index: {}]
  %s4 = inlined_call_operand.vmem [shape: bf16[32,1], index: 4, kind: input, shape index: {}]
  %s5 = inlined_call_operand.vmem [shape: bf16[112,32], index: 5, kind: input, shape index: {}]
  %s6 = inlined_call_operand.vmem [shape: bf16[112,1], index: 6, kind: input, shape index: {}]
  %s7 = inlined_call_operand.vmem [shape: bf16[2,128,8], index: 7, kind: output, shape index: {0}]
  %s8 = inlined_call_operand.vmem [shape: bf16[2,32,8], index: 8, kind: output, shape index: {1}]
  %s9 = inlined_call_operand.vmem [shape: bf16[2,112,8], index: 9, kind: output, shape index: {2}]
  %10 = xla_tuple %s7, %s8, %s9
  %s11 = sld [smem:[#allocation0]]
  $region77: #{tpu_custom_call.1} parent=0
    _
  %s13 = ssub.s32 1, %s11
  %s14 = scalar_select 0, %s13, %s11
  loop: start=0, step=1, limit=4
  $region2: #{tpu_custom_call.1} parent=0 // loop_pre_header
    _
  $region3: #{tpu_custom_call.1} parent=0 // loop_header
    %s16 = sphi 0, %s20
    %p17 = scmp.ge.s32.totalorder %s16, 4
    %s23 = sphi 0, %s35
    %s24 = sphi 0, %s31
    %s25 = sphi 0, %s23
    %s26 = sphi 0, %s24
    %s27 = sphi 0, %s25
    %s28 = sphi 0, %s26
    %s40 = sphi 0, %s42
    %s43 = sphi 0, %s40
    %s44 = sphi 0, %s43
    %s60 = sphi 0, %s44
    %s64 = sphi 0, %s64
    %s66 = sphi 0, %s64
    %s67 = sphi 0, %s66
    %s81 = sphi 0, %s67
    %s85 = sphi 0, %s85
    %s87 = sphi 0, %s85
    %s88 = sphi 0, %s87
    %s102 = sphi 0, %s88
    %s106 = sphi 0, %s106
    %s108 = sphi 0, %s106
    %s109 = sphi 0, %s108
    %s123 = sphi 0, %s109
    %s127 = sphi 0, %s127
    %s129 = sphi 0, %s127
    %s130 = sphi 0, %s129
    %s144 = sphi 0, %s130
    %s148 = sphi 0, %s148
    %s150 = sphi 0, %s148
    %s151 = sphi 0, %s150
    %s165 = sphi 0, %s151
    %s169 = sphi 0, %s169
    %s171 = sphi 0, %s169
    %s172 = sphi 0, %s171
    %s186 = sphi 0, %s172
    %s194 = sphi 0, %s196
    %s197 = sphi 0, %s194
    %s198 = sphi 0, %s197
    %s214 = sphi 0, %s198
    %s222 = sphi 0, %s224
    %s225 = sphi 0, %s222
    %s226 = sphi 0, %s225
    %s242 = sphi 0, %s226
    %s250 = sphi 0, %s252
    %s253 = sphi 0, %s250
    %s254 = sphi 0, %s253
    %s270 = sphi 0, %s254
  $region4: #{tpu_custom_call.1} parent=0 // loop_header_branch
    %19 = sbr.rel (%p17) target = $region8
  $region5: #{tpu_custom_call.1} parent=0 // loop_body
    %s21 = ssub.s32 %s16, 1
    %s22 = ssub.s32 %s16, 2
    %s29 = sadd.s32 1, %s24
    %p30 = scmp.ge.s32.totalorder %s29, 1
    %s31 = scalar_select %p30, 0, %s29
    %s32 = sadd.s32 1, %s23
    %s33 = scalar_select %p30, %s32, %s23
    %p34 = scmp.ge.s32.totalorder %s33, 2
    %s35 = scalar_select %p34, 0, %s33
    %s36 = ssub.s32 %s23, %s35
    %s37 = ssub.s32 %s24, %s31
    %s38 = sor.u32 %s36, %s37
    %p39 = scmp.eq.s32.totalorder %s38, 0
    %s41 = sadd.s32 %s40, 1
    %s42 = scalar_select %p39, %s40, %s41
    %p45 = pneg %p39
    %p46 = scmp.eq.s32.totalorder %s16, 1
    %p47 = por %p45, %p46
    %p48 = scmp.ne.s32.totalorder %s40, %s43
    %p49 = scmp.eq.s32.totalorder %s16, 0
    %p50 = por %p48, %p49
    %p51 = scmp.ne.s32.totalorder %s40, %s43
    %p52 = scmp.eq.s32.totalorder %s21, 1
    %p53 = por %p51, %p52
    %p54 = scmp.ne.s32.totalorder %s43, %s44
    %p55 = scmp.eq.s32.totalorder %s21, 0
    %p56 = por %p54, %p55
    %p57 = scmp.ne.s32.totalorder %s43, %s44
    %p58 = scmp.eq.s32.totalorder %s22, 1
    %p59 = por %p57, %p58
    %p61 = scmp.ne.s32.totalorder %s44, %s60
    %p62 = scmp.eq.s32.totalorder %s22, 0
    %p63 = por %p61, %p62
    %s65 = sadd.s32 %s64, 1
    %p68 = scmp.eq.s32.totalorder %s16, 1
    %p69 = scmp.ne.s32.totalorder %s64, %s66
    %p70 = scmp.eq.s32.totalorder %s16, 0
    %p71 = por %p69, %p70
    %p72 = scmp.ne.s32.totalorder %s64, %s66
    %p73 = scmp.eq.s32.totalorder %s21, 1
    %p74 = por %p72, %p73
    %p75 = scmp.ne.s32.totalorder %s66, %s67
    %p76 = scmp.eq.s32.totalorder %s21, 0
    %p77 = por %p75, %p76
    %p78 = scmp.ne.s32.totalorder %s66, %s67
    %p79 = scmp.eq.s32.totalorder %s22, 1
    %p80 = por %p78, %p79
    %p82 = scmp.ne.s32.totalorder %s67, %s81
    %p83 = scmp.eq.s32.totalorder %s22, 0
    %p84 = por %p82, %p83
    %s86 = sadd.s32 %s85, 1
    %p89 = scmp.eq.s32.totalorder %s16, 1
    %p90 = scmp.ne.s32.totalorder %s85, %s87
    %p91 = scmp.eq.s32.totalorder %s16, 0
    %p92 = por %p90, %p91
    %p93 = scmp.ne.s32.totalorder %s85, %s87
    %p94 = scmp.eq.s32.totalorder %s21, 1
    %p95 = por %p93, %p94
    %p96 = scmp.ne.s32.totalorder %s87, %s88
    %p97 = scmp.eq.s32.totalorder %s21, 0
    %p98 = por %p96, %p97
    %p99 = scmp.ne.s32.totalorder %s87, %s88
    %p100 = scmp.eq.s32.totalorder %s22, 1
    %p101 = por %p99, %p100
    %p103 = scmp.ne.s32.totalorder %s88, %s102
    %p104 = scmp.eq.s32.totalorder %s22, 0
    %p105 = por %p103, %p104
    %s107 = sadd.s32 %s106, 1
    %p110 = scmp.eq.s32.totalorder %s16, 1
    %p111 = scmp.ne.s32.totalorder %s106, %s108
    %p112 = scmp.eq.s32.totalorder %s16, 0
    %p113 = por %p111, %p112
    %p114 = scmp.ne.s32.totalorder %s106, %s108
    %p115 = scmp.eq.s32.totalorder %s21, 1
    %p116 = por %p114, %p115
    %p117 = scmp.ne.s32.totalorder %s108, %s109
    %p118 = scmp.eq.s32.totalorder %s21, 0
    %p119 = por %p117, %p118
    %p120 = scmp.ne.s32.totalorder %s108, %s109
    %p121 = scmp.eq.s32.totalorder %s22, 1
    %p122 = por %p120, %p121
    %p124 = scmp.ne.s32.totalorder %s109, %s123
    %p125 = scmp.eq.s32.totalorder %s22, 0
    %p126 = por %p124, %p125
    %s128 = sadd.s32 %s127, 1
    %p131 = scmp.eq.s32.totalorder %s16, 1
    %p132 = scmp.ne.s32.totalorder %s127, %s129
    %p133 = scmp.eq.s32.totalorder %s16, 0
    %p134 = por %p132, %p133
    %p135 = scmp.ne.s32.totalorder %s127, %s129
    %p136 = scmp.eq.s32.totalorder %s21, 1
    %p137 = por %p135, %p136
    %p138 = scmp.ne.s32.totalorder %s129, %s130
    %p139 = scmp.eq.s32.totalorder %s21, 0
    %p140 = por %p138, %p139
    %p141 = scmp.ne.s32.totalorder %s129, %s130
    %p142 = scmp.eq.s32.totalorder %s22, 1
    %p143 = por %p141, %p142
    %p145 = scmp.ne.s32.totalorder %s130, %s144
    %p146 = scmp.eq.s32.totalorder %s22, 0
    %p147 = por %p145, %p146
    %s149 = sadd.s32 %s148, 1
    %p152 = scmp.eq.s32.totalorder %s16, 1
    %p153 = scmp.ne.s32.totalorder %s148, %s150
    %p154 = scmp.eq.s32.totalorder %s16, 0
    %p155 = por %p153, %p154
    %p156 = scmp.ne.s32.totalorder %s148, %s150
    %p157 = scmp.eq.s32.totalorder %s21, 1
    %p158 = por %p156, %p157
    %p159 = scmp.ne.s32.totalorder %s150, %s151
    %p160 = scmp.eq.s32.totalorder %s21, 0
    %p161 = por %p159, %p160
    %p162 = scmp.ne.s32.totalorder %s150, %s151
    %p163 = scmp.eq.s32.totalorder %s22, 1
    %p164 = por %p162, %p163
    %p166 = scmp.ne.s32.totalorder %s151, %s165
    %p167 = scmp.eq.s32.totalorder %s22, 0
    %p168 = por %p166, %p167
    %s170 = sadd.s32 %s169, 1
    %p173 = scmp.eq.s32.totalorder %s16, 1
    %p174 = scmp.ne.s32.totalorder %s169, %s171
    %p175 = scmp.eq.s32.totalorder %s16, 0
    %p176 = por %p174, %p175
    %p177 = scmp.ne.s32.totalorder %s169, %s171
    %p178 = scmp.eq.s32.totalorder %s21, 1
    %p179 = por %p177, %p178
    %p180 = scmp.ne.s32.totalorder %s171, %s172
    %p181 = scmp.eq.s32.totalorder %s21, 0
    %p182 = por %p180, %p181
    %p183 = scmp.ne.s32.totalorder %s171, %s172
    %p184 = scmp.eq.s32.totalorder %s22, 1
    %p185 = por %p183, %p184
    %p187 = scmp.ne.s32.totalorder %s172, %s186
    %p188 = scmp.eq.s32.totalorder %s22, 0
    %p189 = por %p187, %p188
    %s190 = ssub.s32 %s23, %s35
    %s191 = ssub.s32 %s24, %s31
    %s192 = sor.u32 %s190, %s191
    %p193 = scmp.eq.s32.totalorder %s192, 0
    %s195 = sadd.s32 %s194, 1
    %s196 = scalar_select %p193, %s194, %s195
    %p199 = pneg %p193
    %p200 = scmp.eq.s32.totalorder %s16, 1
    %p201 = por %p199, %p200
    %p202 = scmp.ne.s32.totalorder %s194, %s197
    %p203 = scmp.eq.s32.totalorder %s16, 0
    %p204 = por %p202, %p203
    %p205 = scmp.ne.s32.totalorder %s194, %s197
    %p206 = scmp.eq.s32.totalorder %s21, 1
    %p207 = por %p205, %p206
    %p208 = scmp.ne.s32.totalorder %s197, %s198
    %p209 = scmp.eq.s32.totalorder %s21, 0
    %p210 = por %p208, %p209
    %p211 = scmp.ne.s32.totalorder %s197, %s198
    %p212 = scmp.eq.s32.totalorder %s22, 1
    %p213 = por %p211, %p212
    %p215 = scmp.ne.s32.totalorder %s198, %s214
    %p216 = scmp.eq.s32.totalorder %s22, 0
    %p217 = por %p215, %p216
    %s218 = ssub.s32 %s23, %s35
    %s219 = ssub.s32 %s24, %s31
    %s220 = sor.u32 %s218, %s219
    %p221 = scmp.eq.s32.totalorder %s220, 0
    %s223 = sadd.s32 %s222, 1
    %s224 = scalar_select %p221, %s222, %s223
    %p227 = pneg %p221
    %p228 = scmp.eq.s32.totalorder %s16, 1
    %p229 = por %p227, %p228
    %p230 = scmp.ne.s32.totalorder %s222, %s225
    %p231 = scmp.eq.s32.totalorder %s16, 0
    %p232 = por %p230, %p231
    %p233 = scmp.ne.s32.totalorder %s222, %s225
    %p234 = scmp.eq.s32.totalorder %s21, 1
    %p235 = por %p233, %p234
    %p236 = scmp.ne.s32.totalorder %s225, %s226
    %p237 = scmp.eq.s32.totalorder %s21, 0
    %p238 = por %p236, %p237
    %p239 = scmp.ne.s32.totalorder %s225, %s226
    %p240 = scmp.eq.s32.totalorder %s22, 1
    %p241 = por %p239, %p240
    %p243 = scmp.ne.s32.totalorder %s226, %s242
    %p244 = scmp.eq.s32.totalorder %s22, 0
    %p245 = por %p243, %p244
    %s246 = ssub.s32 %s23, %s35
    %s247 = ssub.s32 %s24, %s31
    %s248 = sor.u32 %s246, %s247
    %p249 = scmp.eq.s32.totalorder %s248, 0
    %s251 = sadd.s32 %s250, 1
    %s252 = scalar_select %p249, %s250, %s251
    %p255 = pneg %p249
    %p256 = scmp.eq.s32.totalorder %s16, 1
    %p257 = por %p255, %p256
    %p258 = scmp.ne.s32.totalorder %s250, %s253
    %p259 = scmp.eq.s32.totalorder %s16, 0
    %p260 = por %p258, %p259
    %p261 = scmp.ne.s32.totalorder %s250, %s253
    %p262 = scmp.eq.s32.totalorder %s21, 1
    %p263 = por %p261, %p262
    %p264 = scmp.ne.s32.totalorder %s253, %s254
    %p265 = scmp.eq.s32.totalorder %s21, 0
    %p266 = por %p264, %p265
    %p267 = scmp.ne.s32.totalorder %s253, %s254
    %p268 = scmp.eq.s32.totalorder %s22, 1
    %p269 = por %p267, %p268
    %p271 = scmp.ne.s32.totalorder %s254, %s270
    %p272 = scmp.eq.s32.totalorder %s22, 0
    %p273 = por %p271, %p272
    %p274 = scmp.le.s32.totalorder 1, %s16
    %p275 = scmp.lt.s32.totalorder %s16, 3
    %p276 = pnand %p274, %p275
    %p277 = pneg %p276
    // Predicated region
    $region9: #{tpu_custom_call.1} parent=5 // pred_check
      _
    $region10: #{tpu_custom_call.1} parent=5 // pred_check_branch
      %279 = sbr.rel (%p276) target = $region12
    $region11: #{tpu_custom_call.1} parent=5 // pred_region
      %s280 = ssub.s32 %s16, 1
      // Predicated region
      $region13: #{tpu_custom_call.1} parent=11 // pred_check
        %p281 = pneg %p77
      $region14: #{tpu_custom_call.1} parent=11 // pred_check_branch
        %283 = sbr.rel (%p281) target = $region16
      $region15: #{tpu_custom_call.1} parent=11 // pred_region
        _
      $region16: #{tpu_custom_call.1} parent=11 // pred_fallthru
        _
      // Predicated region
      $region17: #{tpu_custom_call.1} parent=11 // pred_check
        %p284 = pneg %p98
      $region18: #{tpu_custom_call.1} parent=11 // pred_check_branch
        %286 = sbr.rel (%p284) target = $region20
      $region19: #{tpu_custom_call.1} parent=11 // pred_region
        _
      $region20: #{tpu_custom_call.1} parent=11 // pred_fallthru
        _
      // Predicated region
      $region21: #{tpu_custom_call.1} parent=11 // pred_check
        %p287 = pneg %p119
      $region22: #{tpu_custom_call.1} parent=11 // pred_check_branch
        %289 = sbr.rel (%p287) target = $region24
      $region23: #{tpu_custom_call.1} parent=11 // pred_region
        _
      $region24: #{tpu_custom_call.1} parent=11 // pred_fallthru
        _
      // Predicated region
      $region25: #{tpu_custom_call.1} parent=11 // pred_check
        %p290 = pneg %p140
      $region26: #{tpu_custom_call.1} parent=11 // pred_check_branch
        %292 = sbr.rel (%p290) target = $region28
      $region27: #{tpu_custom_call.1} parent=11 // pred_region
        _
      $region28: #{tpu_custom_call.1} parent=11 // pred_fallthru
        _
      // Predicated region
      $region29: #{tpu_custom_call.1} parent=11 // pred_check
        %p293 = pneg %p161
      $region30: #{tpu_custom_call.1} parent=11 // pred_check_branch
        %295 = sbr.rel (%p293) target = $region32
      $region31: #{tpu_custom_call.1} parent=11 // pred_region
        _
      $region32: #{tpu_custom_call.1} parent=11 // pred_fallthru
        _
      // Predicated region
      $region33: #{tpu_custom_call.1} parent=11 // pred_check
        %p296 = pneg %p182
      $region34: #{tpu_custom_call.1} parent=11 // pred_check_branch
        %298 = sbr.rel (%p296) target = $region36
      $region35: #{tpu_custom_call.1} parent=11 // pred_region
        _
      $region36: #{tpu_custom_call.1} parent=11 // pred_fallthru
        _
    $region12: #{tpu_custom_call.1} parent=5 // pred_fallthru
      _
    %p299 = scmp.lt.s32.totalorder %s16, 2
    // Predicated region
    $region37: #{tpu_custom_call.1} parent=5 // pred_check
      %p300 = pneg %p299
    $region38: #{tpu_custom_call.1} parent=5 // pred_check_branch
      %302 = sbr.rel (%p300) target = $region40
    $region39: #{tpu_custom_call.1} parent=5 // pred_region
      // Predicated region
      $region41: #{tpu_custom_call.1} parent=39 // pred_check
        %p303 = pneg %p50
      $region42: #{tpu_custom_call.1} parent=39 // pred_check_branch
        %305 = sbr.rel (%p303) target = $region44
      $region43: #{tpu_custom_call.1} parent=39 // pred_region
        %p306 = scmp.lt.s32.totalorder %s23, 1
        %s307 = scalar_select %p306, %s23, 1
        %p308 = scmp.lt.s32.totalorder %s24, 0
        %s309 = scalar_select %p308, %s24, 0
        %s310 = smul.addr %s307, 8
        %s311 = sadd.s32 %s309, %s310
        %s312 = smul.addr %s311, 8
        %s313 = scalar_lea.vmem %s0, %s312
      $region44: #{tpu_custom_call.1} parent=39 // pred_fallthru
        _
    $region40: #{tpu_custom_call.1} parent=5 // pred_fallthru
      _
    %p314 = scmp.le.s32.totalorder 1, %s16
    %p315 = scmp.lt.s32.totalorder %s16, 3
    %p316 = pnand %p314, %p315
    %p317 = pneg %p316
    // Predicated region
    $region45: #{tpu_custom_call.1} parent=5 // pred_check
      _
    $region46: #{tpu_custom_call.1} parent=5 // pred_check_branch
      %319 = sbr.rel (%p316) target = $region48
    $region47: #{tpu_custom_call.1} parent=5 // pred_region
      %s320 = ssub.s32 %s16, 1
      %p321 = scmp.lt.s32.totalorder %s25, 1
      %s322 = scalar_select %p321, %s25, 1
      %p323 = scmp.lt.s32.totalorder %s26, 0
      %s324 = scalar_select %p323, %s26, 0
      %s325 = smul.addr %s322, 8
      %s326 = sadd.s32 %s324, %s325
      %s327 = smul.addr %s326, 8
      %s328 = scalar_lea.vmem %s0, %s327
      %p329 = pneg %p56
      %p330 = pneg %p53
      %p331 = pneg %p77
      %p332 = pneg %p74
      %p333 = pneg %p98
      %p334 = pneg %p95
      %p335 = pneg %p119
      %p336 = pneg %p116
      %p337 = pneg %p140
      %p338 = pneg %p137
      %p339 = pneg %p161
      %p340 = pneg %p158
      %p341 = pneg %p182
      %p342 = pneg %p179
      %p343 = pneg %p210
      %p344 = pneg %p207
      %p345 = scmp.lt.s32.totalorder %s25, 1
      %s346 = scalar_select %p345, %s25, 1
      %p347 = scmp.lt.s32.totalorder %s26, 0
      %s348 = scalar_select %p347, %s26, 0
      %s349 = smul.addr %s346, 16
      %s350 = sadd.s32 %s348, %s349
      %s351 = smul.addr %s350, 4
      %s352 = scalar_lea.vmem %s7, %s351
      %p353 = pneg %p238
      %p354 = pneg %p235
      %p355 = scmp.lt.s32.totalorder %s25, 1
      %s356 = scalar_select %p355, %s25, 1
      %p357 = scmp.lt.s32.totalorder %s26, 0
      %s358 = scalar_select %p357, %s26, 0
      %s359 = smul.addr %s356, 4
      %s360 = sadd.s32 %s358, %s359
      %s361 = smul.addr %s360, 4
      %s362 = scalar_lea.vmem %s8, %s361
      %p363 = pneg %p266
      %p364 = pneg %p263
      %p365 = scmp.lt.s32.totalorder %s25, 1
      %s366 = scalar_select %p365, %s25, 1
      %p367 = scmp.lt.s32.totalorder %s26, 0
      %s368 = scalar_select %p367, %s26, 0
      %s369 = smul.addr %s366, 14
      %s370 = sadd.s32 %s368, %s369
      %s371 = smul.addr %s370, 4
      %s372 = scalar_lea.vmem %s9, %s371
      %p373 = scmp.lt.s32.totalorder %s25, 1
      %s374 = scalar_select %p373, %s25, 1
      %p375 = scmp.lt.s32.totalorder %s26, 0
      %s376 = scalar_select %p375, %s26, 0
      %s377 = smul.addr %s374, 8
      %s378 = sadd.s32 %s376, %s377
      %s379 = smul.addr %s378, 8
      %s380 = scalar_lea.vmem %s0, %s379
      %p381 = scmp.lt.s32.totalorder %s25, 1
      %s382 = scalar_select %p381, %s25, 1
      %p383 = scmp.lt.s32.totalorder %s26, 0
      %s384 = scalar_select %p383, %s26, 0
      %s385 = smul.addr %s382, 16
      %s386 = sadd.s32 %s384, %s385
      %s387 = smul.addr %s386, 4
      %s388 = scalar_lea.vmem %s7, %s387
      %p389 = scmp.lt.s32.totalorder %s25, 1
      %s390 = scalar_select %p389, %s25, 1
      %p391 = scmp.lt.s32.totalorder %s26, 0
      %s392 = scalar_select %p391, %s26, 0
      %s393 = smul.addr %s390, 4
      %s394 = sadd.s32 %s392, %s393
      %s395 = smul.addr %s394, 4
      %s396 = scalar_lea.vmem %s8, %s395
      %p397 = scmp.lt.s32.totalorder %s25, 1
      %s398 = scalar_select %p397, %s25, 1
      %p399 = scmp.lt.s32.totalorder %s26, 0
      %s400 = scalar_select %p399, %s26, 0
      %s401 = smul.addr %s398, 14
      %s402 = sadd.s32 %s400, %s401
      %s403 = smul.addr %s402, 4
      %s404 = scalar_lea.vmem %s9, %s403
      %v406 = vld [vmem:[%s380] sm:$0xff]
      %v407 = vld [vmem:[%s380 + $0x8] sm:$0xff]
      %v408 = vld [vmem:[%s380 + $0x10] sm:$0xff]
      %v409 = vld [vmem:[%s380 + $0x18] sm:$0xff]
      %v410 = vld [vmem:[%s380 + $0x20] sm:$0xff]
      %v411 = vld [vmem:[%s380 + $0x28] sm:$0xff]
      %v412 = vld [vmem:[%s380 + $0x30] sm:$0xff]
      %v413 = vld [vmem:[%s380 + $0x38] sm:$0xff]
      %v414 = vpack.c.bf16 %v407, %v406
      %v415 = vpack.c.bf16 %v409, %v408
      %v416 = vpack.c.bf16 %v411, %v410
      %v417 = vpack.c.bf16 %v413, %v412
      %v418 = vld [vmem:[%s1] sm:$0xf]
      %v419 = vld [vmem:[%s1 + $0x4] sm:$0xf]
      %v420 = vld [vmem:[%s1 + $0x8] sm:$0xf]
      %v421 = vld [vmem:[%s1 + $0xc] sm:$0xf]
      %v422 = vld [vmem:[%s1 + $0x10] sm:$0xf]
      %v423 = vld [vmem:[%s1 + $0x14] sm:$0xf]
      %v424 = vld [vmem:[%s1 + $0x18] sm:$0xf]
      %v425 = vld [vmem:[%s1 + $0x1c] sm:$0xf]
      %v426 = vld [vmem:[%s1 + $0x20] sm:$0xf]
      %v427 = vld [vmem:[%s1 + $0x24] sm:$0xf]
      %v428 = vld [vmem:[%s1 + $0x28] sm:$0xf]
      %v429 = vld [vmem:[%s1 + $0x2c] sm:$0xf]
      %v430 = vld [vmem:[%s1 + $0x30] sm:$0xf]
      %v431 = vld [vmem:[%s1 + $0x34] sm:$0xf]
      %v432 = vld [vmem:[%s1 + $0x38] sm:$0xf]
      %v433 = vld [vmem:[%s1 + $0x3c] sm:$0xf]
      %v434 = vld [vmem:[%s2] sm:$0xf]
      %v435 = vld [vmem:[%s2 + $0x4] sm:$0xf]
      %v436 = vld [vmem:[%s2 + $0x8] sm:$0xf]
      %v437 = vld [vmem:[%s2 + $0xc] sm:$0xf]
      %v438 = vld [vmem:[%s2 + $0x10] sm:$0xf]
      %v439 = vld [vmem:[%s2 + $0x14] sm:$0xf]
      %v440 = vld [vmem:[%s2 + $0x18] sm:$0xf]
      %v441 = vld [vmem:[%s2 + $0x1c] sm:$0xf]
      %v442 = vld [vmem:[%s2 + $0x20] sm:$0xf]
      %v443 = vld [vmem:[%s2 + $0x24] sm:$0xf]
      %v444 = vld [vmem:[%s2 + $0x28] sm:$0xf]
      %v445 = vld [vmem:[%s2 + $0x2c] sm:$0xf]
      %v446 = vld [vmem:[%s2 + $0x30] sm:$0xf]
      %v447 = vld [vmem:[%s2 + $0x34] sm:$0xf]
      %v448 = vld [vmem:[%s2 + $0x38] sm:$0xf]
      %v449 = vld [vmem:[%s2 + $0x3c] sm:$0xf]
      %v450 = vunpack.c.l.bf16 %v434
      %v451 = vunpack.c.l.bf16 %v435
      %v452 = vunpack.c.l.bf16 %v436
      %v453 = vunpack.c.l.bf16 %v437
      %v454 = vunpack.c.l.bf16 %v438
      %v455 = vunpack.c.l.bf16 %v439
      %v456 = vunpack.c.l.bf16 %v440
      %v457 = vunpack.c.l.bf16 %v441
      %v458 = vunpack.c.l.bf16 %v442
      %v459 = vunpack.c.l.bf16 %v443
      %v460 = vunpack.c.l.bf16 %v444
      %v461 = vunpack.c.l.bf16 %v445
      %v462 = vunpack.c.l.bf16 %v446
      %v463 = vunpack.c.l.bf16 %v447
      %v464 = vunpack.c.l.bf16 %v448
      %v465 = vunpack.c.l.bf16 %v449
      %467 = vset.pattern.permute.xlu0 0
      %468 = vperm.xlu0 %467, %v450
      %v469 = vpop.permute.xlu0 %468
      %472 = vset.pattern.permute.xlu0 0
      %473 = vperm.xlu0 %472, %v451
      %v474 = vpop.permute.xlu0 %473
      %477 = vset.pattern.permute.xlu0 0
      %478 = vperm.xlu0 %477, %v452
      %v479 = vpop.permute.xlu0 %478
      %482 = vset.pattern.permute.xlu0 0
      %483 = vperm.xlu0 %482, %v453
      %v484 = vpop.permute.xlu0 %483
      %487 = vset.pattern.permute.xlu0 0
      %488 = vperm.xlu0 %487, %v454
      %v489 = vpop.permute.xlu0 %488
      %492 = vset.pattern.permute.xlu0 0
      %493 = vperm.xlu0 %492, %v455
      %v494 = vpop.permute.xlu0 %493
      %497 = vset.pattern.permute.xlu0 0
      %498 = vperm.xlu0 %497, %v456
      %v499 = vpop.permute.xlu0 %498
      %502 = vset.pattern.permute.xlu0 0
      %503 = vperm.xlu0 %502, %v457
      %v504 = vpop.permute.xlu0 %503
      %507 = vset.pattern.permute.xlu0 0
      %508 = vperm.xlu0 %507, %v458
      %v509 = vpop.permute.xlu0 %508
      %512 = vset.pattern.permute.xlu0 0
      %513 = vperm.xlu0 %512, %v459
      %v514 = vpop.permute.xlu0 %513
      %517 = vset.pattern.permute.xlu0 0
      %518 = vperm.xlu0 %517, %v460
      %v519 = vpop.permute.xlu0 %518
      %522 = vset.pattern.permute.xlu0 0
      %523 = vperm.xlu0 %522, %v461
      %v524 = vpop.permute.xlu0 %523
      %527 = vset.pattern.permute.xlu0 0
      %528 = vperm.xlu0 %527, %v462
      %v529 = vpop.permute.xlu0 %528
      %532 = vset.pattern.permute.xlu0 0
      %533 = vperm.xlu0 %532, %v463
      %v534 = vpop.permute.xlu0 %533
      %537 = vset.pattern.permute.xlu0 0
      %538 = vperm.xlu0 %537, %v464
      %v539 = vpop.permute.xlu0 %538
      %542 = vset.pattern.permute.xlu0 0
      %543 = vperm.xlu0 %542, %v465
      %v544 = vpop.permute.xlu0 %543
      %v562 = vunpack.c.l.b16 %v418
      %v563 = vunpack.c.l.b16 %v419
      %v564 = vunpack.c.l.b16 %v420
      %v565 = vunpack.c.l.b16 %v421
      %v566 = vunpack.c.l.b16 %v422
      %v567 = vunpack.c.l.b16 %v423
      %v568 = vunpack.c.l.b16 %v424
      %v569 = vunpack.c.l.b16 %v425
      %v570 = vunpack.c.l.b16 %v426
      %v571 = vunpack.c.l.b16 %v427
      %v572 = vunpack.c.l.b16 %v428
      %v573 = vunpack.c.l.b16 %v429
      %v574 = vunpack.c.l.b16 %v430
      %v575 = vunpack.c.l.b16 %v431
      %v576 = vunpack.c.l.b16 %v432
      %v577 = vunpack.c.l.b16 %v433
      %v578 = vpack.c.b16 %v563, %v562
      %v579 = vpack.c.b16 %v565, %v564
      %v580 = vpack.c.b16 %v567, %v566
      %v581 = vpack.c.b16 %v569, %v568
      %v582 = vpack.c.b16 %v571, %v570
      %v583 = vpack.c.b16 %v573, %v572
      %v584 = vpack.c.b16 %v575, %v574
      %v585 = vpack.c.b16 %v577, %v576
      %vm586 = vcmask 523264
      %v588 = vsel %vm586, %v578, 0
      %v591 = vsel %vm586, %v579, 0
      %v594 = vsel %vm586, %v580, 0
      %v597 = vsel %vm586, %v581, 0
      %v600 = vsel %vm586, %v582, 0
      %v603 = vsel %vm586, %v583, 0
      %v606 = vsel %vm586, %v584, 0
      %v609 = vsel %vm586, %v585, 0
      %611 = vmatprep.subr.bf16.mxu0 0
      %612 = vmatpush1.bf16.msra.mxu0 0
      %613 = vmatprep.subr.bf16.mxu0 0
      %614 = vmatpush1.bf16.msra.mxu0 0
      %615 = vmatprep.subr.bf16.mxu0 0
      %616 = vmatpush1.bf16.msra.mxu0 0
      %617 = vmatprep.subr.bf16.mxu0 0
      %618 = vmatpush1.bf16.msra.mxu0 0
      %619 = vmatprep.subr.bf16.mxu0 0
      %620 = vmatpush1.bf16.msra.mxu0 %v417
      %621 = vmatprep.subr.bf16.mxu0 0
      %622 = vmatpush1.bf16.msra.mxu0 %v416
      %623 = vmatprep.subr.bf16.mxu0 0
      %624 = vmatpush1.bf16.msra.mxu0 %v415
      %625 = vmatprep.subr.bf16.mxu0 0
      %626 = vmatpush1.bf16.msra.mxu0 %v414
      %627 = vmatprep.subr.bf16.mxu0 0
      %628 = vmatpush2.bf16.msra.mxu0 0
      %629 = vmatprep.subr.bf16.mxu0 0
      %630 = vmatpush2.bf16.msra.mxu0 0
      %631 = vmatprep.subr.bf16.mxu0 0
      %632 = vmatpush2.bf16.msra.mxu0 0
      %633 = vmatprep.subr.bf16.mxu0 0
      %634 = vmatpush2.bf16.msra.mxu0 0
      %635 = vmatprep.subr.bf16.mxu0 0
      %636 = vmatpush2.bf16.msra.mxu0 0
      %637 = vmatprep.subr.bf16.mxu0 0
      %638 = vmatpush2.bf16.msra.mxu0 0
      %639 = vmatprep.subr.bf16.mxu0 0
      %640 = vmatpush2.bf16.msra.mxu0 0
      %641 = vmatprep.subr.bf16.mxu0 0
      %642 = vmatpush2.bf16.msra.mxu0 0
      %643 = vmatprep.mubr.bf16.mxu0 0
      %644 = vmatmul.mubr.bf16.gmra.mxu0 %v588
      %v645 = vpop.f32.mrf.mxu0
      %v646 = vadd.f32 %v469, %v645
      %v647 = vpop.f32.mrf.mxu0
      %v648 = vpop.f32.mrf.mxu0
      %v649 = vadd.f32 %v474, %v648
      %v650 = vpop.f32.mrf.mxu0
      %651 = vmatprep.mubr.bf16.mxu0 0
      %652 = vmatmul.mubr.bf16.gmra.mxu0 %v591
      %v653 = vpop.f32.mrf.mxu0
      %v654 = vadd.f32 %v479, %v653
      %v655 = vpop.f32.mrf.mxu0
      %v656 = vpop.f32.mrf.mxu0
      %v657 = vadd.f32 %v484, %v656
      %v658 = vpop.f32.mrf.mxu0
      %659 = vmatprep.mubr.bf16.mxu0 0
      %660 = vmatmul.mubr.bf16.gmra.mxu0 %v594
      %v661 = vpop.f32.mrf.mxu0
      %v662 = vadd.f32 %v489, %v661
      %v663 = vpop.f32.mrf.mxu0
      %v664 = vpop.f32.mrf.mxu0
      %v665 = vadd.f32 %v494, %v664
      %v666 = vpop.f32.mrf.mxu0
      %667 = vmatprep.mubr.bf16.mxu0 0
      %668 = vmatmul.mubr.bf16.gmra.mxu0 %v597
      %v669 = vpop.f32.mrf.mxu0
      %v670 = vadd.f32 %v499, %v669
      %v671 = vpop.f32.mrf.mxu0
      %v672 = vpop.f32.mrf.mxu0
      %v673 = vadd.f32 %v504, %v672
      %v674 = vpop.f32.mrf.mxu0
      %675 = vmatprep.mubr.bf16.mxu0 0
      %676 = vmatmul.mubr.bf16.gmra.mxu0 %v600
      %v677 = vpop.f32.mrf.mxu0
      %v678 = vadd.f32 %v509, %v677
      %v679 = vpop.f32.mrf.mxu0
      %v680 = vpop.f32.mrf.mxu0
      %v681 = vadd.f32 %v514, %v680
      %v682 = vpop.f32.mrf.mxu0
      %683 = vmatprep.mubr.bf16.mxu0 0
      %684 = vmatmul.mubr.bf16.gmra.mxu0 %v603
      %v685 = vpop.f32.mrf.mxu0
      %v686 = vadd.f32 %v519, %v685
      %v687 = vpop.f32.mrf.mxu0
      %v688 = vpop.f32.mrf.mxu0
      %v689 = vadd.f32 %v524, %v688
      %v690 = vpop.f32.mrf.mxu0
      %691 = vmatprep.mubr.bf16.mxu0 0
      %692 = vmatmul.mubr.bf16.gmra.mxu0 %v606
      %v693 = vpop.f32.mrf.mxu0
      %v694 = vadd.f32 %v529, %v693
      %v695 = vpop.f32.mrf.mxu0
      %v696 = vpop.f32.mrf.mxu0
      %v697 = vadd.f32 %v534, %v696
      %v698 = vpop.f32.mrf.mxu0
      %699 = vmatprep.mubr.bf16.mxu0 0
      %700 = vmatmul.mubr.bf16.gmra.mxu0 %v609
      %v701 = vpop.f32.mrf.mxu0
      %v702 = vadd.f32 %v539, %v701
      %v703 = vpop.f32.mrf.mxu0
      %v704 = vpop.f32.mrf.mxu0
      %v705 = vadd.f32 %v544, %v704
      %v706 = vpop.f32.mrf.mxu0
      %707 = vdwg.mxu0
      %v708 = vpack.c.bf16 %v649, %v646
      %v709 = vpack.c.bf16 %v657, %v654
      %v710 = vpack.c.bf16 %v665, %v662
      %v711 = vpack.c.bf16 %v673, %v670
      %v712 = vpack.c.bf16 %v681, %v678
      %v713 = vpack.c.bf16 %v689, %v686
      %v714 = vpack.c.bf16 %v697, %v694
      %v715 = vpack.c.bf16 %v705, %v702
      %v724 = vunpack.c.l.b16 %v708
      %v725 = vunpack.c.h.b16 %v708
      %v726 = vunpack.c.l.b16 %v709
      %v727 = vunpack.c.h.b16 %v709
      %v728 = vunpack.c.l.b16 %v710
      %v729 = vunpack.c.h.b16 %v710
      %v730 = vunpack.c.l.b16 %v711
      %v731 = vunpack.c.h.b16 %v711
      %v732 = vunpack.c.l.b16 %v712
      %v733 = vunpack.c.h.b16 %v712
      %v734 = vunpack.c.l.b16 %v713
      %v735 = vunpack.c.h.b16 %v713
      %v736 = vunpack.c.l.b16 %v714
      %v737 = vunpack.c.h.b16 %v714
      %v738 = vunpack.c.l.b16 %v715
      %v739 = vunpack.c.h.b16 %v715
      %v740 = vpack.c.b16 %v724, %v724
      %v741 = vpack.c.b16 %v725, %v725
      %v742 = vpack.c.b16 %v726, %v726
      %v743 = vpack.c.b16 %v727, %v727
      %v744 = vpack.c.b16 %v728, %v728
      %v745 = vpack.c.b16 %v729, %v729
      %v746 = vpack.c.b16 %v730, %v730
      %v747 = vpack.c.b16 %v731, %v731
      %v748 = vpack.c.b16 %v732, %v732
      %v749 = vpack.c.b16 %v733, %v733
      %v750 = vpack.c.b16 %v734, %v734
      %v751 = vpack.c.b16 %v735, %v735
      %v752 = vpack.c.b16 %v736, %v736
      %v753 = vpack.c.b16 %v737, %v737
      %v754 = vpack.c.b16 %v738, %v738
      %v755 = vpack.c.b16 %v739, %v739
      %vm772 = vcmask 60416
      %773 = vst.msk [vmem:[%s388] sm:$0xf] %vm772, %v740
      %774 = vst.msk [vmem:[%s388 + $0x4] sm:$0xf] %vm772, %v741
      %775 = vst.msk [vmem:[%s388 + $0x8] sm:$0xf] %vm772, %v742
      %776 = vst.msk [vmem:[%s388 + $0xc] sm:$0xf] %vm772, %v743
      %777 = vst.msk [vmem:[%s388 + $0x10] sm:$0xf] %vm772, %v744
      %778 = vst.msk [vmem:[%s388 + $0x14] sm:$0xf] %vm772, %v745
      %779 = vst.msk [vmem:[%s388 + $0x18] sm:$0xf] %vm772, %v746
      %780 = vst.msk [vmem:[%s388 + $0x1c] sm:$0xf] %vm772, %v747
      %781 = vst.msk [vmem:[%s388 + $0x20] sm:$0xf] %vm772, %v748
      %782 = vst.msk [vmem:[%s388 + $0x24] sm:$0xf] %vm772, %v749
      %783 = vst.msk [vmem:[%s388 + $0x28] sm:$0xf] %vm772, %v750
      %784 = vst.msk [vmem:[%s388 + $0x2c] sm:$0xf] %vm772, %v751
      %785 = vst.msk [vmem:[%s388 + $0x30] sm:$0xf] %vm772, %v752
      %786 = vst.msk [vmem:[%s388 + $0x34] sm:$0xf] %vm772, %v753
      %787 = vst.msk [vmem:[%s388 + $0x38] sm:$0xf] %vm772, %v754
      %788 = vst.msk [vmem:[%s388 + $0x3c] sm:$0xf] %vm772, %v755
      %v789 = vld [vmem:[%s3] sm:$0xf]
      %v790 = vld [vmem:[%s3 + $0x4] sm:$0xf]
      %v791 = vld [vmem:[%s3 + $0x8] sm:$0xf]
      %v792 = vld [vmem:[%s3 + $0xc] sm:$0xf]
      %v793 = vld [vmem:[%s4] sm:$0xf]
      %v794 = vld [vmem:[%s4 + $0x4] sm:$0xf]
      %v795 = vld [vmem:[%s4 + $0x8] sm:$0xf]
      %v796 = vld [vmem:[%s4 + $0xc] sm:$0xf]
      %v797 = vunpack.c.l.bf16 %v793
      %v798 = vunpack.c.l.bf16 %v794
      %v799 = vunpack.c.l.bf16 %v795
      %v800 = vunpack.c.l.bf16 %v796
      %802 = vset.pattern.permute.xlu0 0
      %803 = vperm.xlu0 %802, %v797
      %v804 = vpop.permute.xlu0 %803
      %807 = vset.pattern.permute.xlu0 0
      %808 = vperm.xlu0 %807, %v798
      %v809 = vpop.permute.xlu0 %808
      %812 = vset.pattern.permute.xlu0 0
      %813 = vperm.xlu0 %812, %v799
      %v814 = vpop.permute.xlu0 %813
      %817 = vset.pattern.permute.xlu0 0
      %818 = vperm.xlu0 %817, %v800
      %v819 = vpop.permute.xlu0 %818
      %v825 = vunpack.c.l.b16 %v789
      %v826 = vunpack.c.l.b16 %v790
      %v827 = vunpack.c.l.b16 %v791
      %v828 = vunpack.c.l.b16 %v792
      %v829 = vpack.c.b16 %v826, %v825
      %v830 = vpack.c.b16 %v828, %v827
      %833 = vmatprep.subr.bf16.mxu0 0
      %834 = vmatpush1.bf16.msra.mxu0 %v715
      %835 = vmatprep.subr.bf16.mxu0 0
      %836 = vmatpush1.bf16.msra.mxu0 %v714
      %837 = vmatprep.subr.bf16.mxu0 0
      %838 = vmatpush1.bf16.msra.mxu0 %v713
      %839 = vmatprep.subr.bf16.mxu0 0
      %840 = vmatpush1.bf16.msra.mxu0 %v712
      %841 = vmatprep.subr.bf16.mxu0 0
      %842 = vmatpush1.bf16.msra.mxu0 %v711
      %843 = vmatprep.subr.bf16.mxu0 0
      %844 = vmatpush1.bf16.msra.mxu0 %v710
      %845 = vmatprep.subr.bf16.mxu0 0
      %846 = vmatpush1.bf16.msra.mxu0 %v709
      %847 = vmatprep.subr.bf16.mxu0 0
      %848 = vmatpush1.bf16.msra.mxu0 %v708
      %849 = vmatprep.subr.bf16.mxu0 0
      %850 = vmatpush2.bf16.msra.mxu0 0
      %851 = vmatprep.subr.bf16.mxu0 0
      %852 = vmatpush2.bf16.msra.mxu0 0
      %853 = vmatprep.subr.bf16.mxu0 0
      %854 = vmatpush2.bf16.msra.mxu0 0
      %855 = vmatprep.subr.bf16.mxu0 0
      %856 = vmatpush2.bf16.msra.mxu0 0
      %857 = vmatprep.subr.bf16.mxu0 0
      %858 = vmatpush2.bf16.msra.mxu0 0
      %859 = vmatprep.subr.bf16.mxu0 0
      %860 = vmatpush2.bf16.msra.mxu0 0
      %861 = vmatprep.subr.bf16.mxu0 0
      %862 = vmatpush2.bf16.msra.mxu0 0
      %863 = vmatprep.subr.bf16.mxu0 0
      %864 = vmatpush2.bf16.msra.mxu0 0
      %865 = vmatprep.mubr.bf16.mxu0 0
      %866 = vmatmul.mubr.bf16.gmra.mxu0 %v829
      %v867 = vpop.f32.mrf.mxu0
      %v868 = vadd.f32 %v804, %v867
      %v869 = vpop.f32.mrf.mxu0
      %v870 = vpop.f32.mrf.mxu0
      %v871 = vadd.f32 %v809, %v870
      %v872 = vpop.f32.mrf.mxu0
      %873 = vmatprep.mubr.bf16.mxu0 0
      %874 = vmatmul.mubr.bf16.gmra.mxu0 %v830
      %v875 = vpop.f32.mrf.mxu0
      %v876 = vadd.f32 %v814, %v875
      %v877 = vpop.f32.mrf.mxu0
      %v878 = vpop.f32.mrf.mxu0
      %v879 = vadd.f32 %v819, %v878
      %v880 = vpop.f32.mrf.mxu0
      %881 = vdwg.mxu0
      %v882 = vpack.c.bf16 %v871, %v868
      %v883 = vpack.c.bf16 %v879, %v876
      %v886 = vunpack.c.l.b16 %v882
      %v887 = vunpack.c.h.b16 %v882
      %v888 = vunpack.c.l.b16 %v883
      %v889 = vunpack.c.h.b16 %v883
      %v890 = vpack.c.b16 %v886, %v886
      %v891 = vpack.c.b16 %v887, %v887
      %v892 = vpack.c.b16 %v888, %v888
      %v893 = vpack.c.b16 %v889, %v889
      %898 = vst.msk [vmem:[%s396] sm:$0xf] %vm772, %v890
      %899 = vst.msk [vmem:[%s396 + $0x4] sm:$0xf] %vm772, %v891
      %900 = vst.msk [vmem:[%s396 + $0x8] sm:$0xf] %vm772, %v892
      %901 = vst.msk [vmem:[%s396 + $0xc] sm:$0xf] %vm772, %v893
      %v902 = vld [vmem:[%s5] sm:$0xf]
      %v903 = vld [vmem:[%s5 + $0x4] sm:$0xf]
      %v904 = vld [vmem:[%s5 + $0x8] sm:$0xf]
      %v905 = vld [vmem:[%s5 + $0xc] sm:$0xf]
      %v906 = vld [vmem:[%s5 + $0x10] sm:$0xf]
      %v907 = vld [vmem:[%s5 + $0x14] sm:$0xf]
      %v908 = vld [vmem:[%s5 + $0x18] sm:$0xf]
      %v909 = vld [vmem:[%s5 + $0x1c] sm:$0xf]
      %v910 = vld [vmem:[%s5 + $0x20] sm:$0xf]
      %v911 = vld [vmem:[%s5 + $0x24] sm:$0xf]
      %v912 = vld [vmem:[%s5 + $0x28] sm:$0xf]
      %v913 = vld [vmem:[%s5 + $0x2c] sm:$0xf]
      %v914 = vld [vmem:[%s5 + $0x30] sm:$0xf]
      %v915 = vld [vmem:[%s5 + $0x34] sm:$0xf]
      %v916 = vld [vmem:[%s6] sm:$0xf]
      %v917 = vld [vmem:[%s6 + $0x4] sm:$0xf]
      %v918 = vld [vmem:[%s6 + $0x8] sm:$0xf]
      %v919 = vld [vmem:[%s6 + $0xc] sm:$0xf]
      %v920 = vld [vmem:[%s6 + $0x10] sm:$0xf]
      %v921 = vld [vmem:[%s6 + $0x14] sm:$0xf]
      %v922 = vld [vmem:[%s6 + $0x18] sm:$0xf]
      %v923 = vld [vmem:[%s6 + $0x1c] sm:$0xf]
      %v924 = vld [vmem:[%s6 + $0x20] sm:$0xf]
      %v925 = vld [vmem:[%s6 + $0x24] sm:$0xf]
      %v926 = vld [vmem:[%s6 + $0x28] sm:$0xf]
      %v927 = vld [vmem:[%s6 + $0x2c] sm:$0xf]
      %v928 = vld [vmem:[%s6 + $0x30] sm:$0xf]
      %v929 = vld [vmem:[%s6 + $0x34] sm:$0xf]
      %v930 = vunpack.c.l.bf16 %v916
      %v931 = vunpack.c.l.bf16 %v917
      %v932 = vunpack.c.l.bf16 %v918
      %v933 = vunpack.c.l.bf16 %v919
      %v934 = vunpack.c.l.bf16 %v920
      %v935 = vunpack.c.l.bf16 %v921
      %v936 = vunpack.c.l.bf16 %v922
      %v937 = vunpack.c.l.bf16 %v923
      %v938 = vunpack.c.l.bf16 %v924
      %v939 = vunpack.c.l.bf16 %v925
      %v940 = vunpack.c.l.bf16 %v926
      %v941 = vunpack.c.l.bf16 %v927
      %v942 = vunpack.c.l.bf16 %v928
      %v943 = vunpack.c.l.bf16 %v929
      %945 = vset.pattern.permute.xlu0 0
      %946 = vperm.xlu0 %945, %v930
      %v947 = vpop.permute.xlu0 %946
      %950 = vset.pattern.permute.xlu0 0
      %951 = vperm.xlu0 %950, %v931
      %v952 = vpop.permute.xlu0 %951
      %955 = vset.pattern.permute.xlu0 0
      %956 = vperm.xlu0 %955, %v932
      %v957 = vpop.permute.xlu0 %956
      %960 = vset.pattern.permute.xlu0 0
      %961 = vperm.xlu0 %960, %v933
      %v962 = vpop.permute.xlu0 %961
      %965 = vset.pattern.permute.xlu0 0
      %966 = vperm.xlu0 %965, %v934
      %v967 = vpop.permute.xlu0 %966
      %970 = vset.pattern.permute.xlu0 0
      %971 = vperm.xlu0 %970, %v935
      %v972 = vpop.permute.xlu0 %971
      %975 = vset.pattern.permute.xlu0 0
      %976 = vperm.xlu0 %975, %v936
      %v977 = vpop.permute.xlu0 %976
      %980 = vset.pattern.permute.xlu0 0
      %981 = vperm.xlu0 %980, %v937
      %v982 = vpop.permute.xlu0 %981
      %985 = vset.pattern.permute.xlu0 0
      %986 = vperm.xlu0 %985, %v938
      %v987 = vpop.permute.xlu0 %986
      %990 = vset.pattern.permute.xlu0 0
      %991 = vperm.xlu0 %990, %v939
      %v992 = vpop.permute.xlu0 %991
      %995 = vset.pattern.permute.xlu0 0
      %996 = vperm.xlu0 %995, %v940
      %v997 = vpop.permute.xlu0 %996
      %1000 = vset.pattern.permute.xlu0 0
      %1001 = vperm.xlu0 %1000, %v941
      %v1002 = vpop.permute.xlu0 %1001
      %1005 = vset.pattern.permute.xlu0 0
      %1006 = vperm.xlu0 %1005, %v942
      %v1007 = vpop.permute.xlu0 %1006
      %1010 = vset.pattern.permute.xlu0 0
      %1011 = vperm.xlu0 %1010, %v943
      %v1012 = vpop.permute.xlu0 %1011
      %v1028 = vunpack.c.l.b16 %v902
      %v1029 = vunpack.c.l.b16 %v903
      %v1030 = vunpack.c.l.b16 %v904
      %v1031 = vunpack.c.l.b16 %v905
      %v1032 = vunpack.c.l.b16 %v906
      %v1033 = vunpack.c.l.b16 %v907
      %v1034 = vunpack.c.l.b16 %v908
      %v1035 = vunpack.c.l.b16 %v909
      %v1036 = vunpack.c.l.b16 %v910
      %v1037 = vunpack.c.l.b16 %v911
      %v1038 = vunpack.c.l.b16 %v912
      %v1039 = vunpack.c.l.b16 %v913
      %v1040 = vunpack.c.l.b16 %v914
      %v1041 = vunpack.c.l.b16 %v915
      %v1042 = vpack.c.b16 %v1029, %v1028
      %v1043 = vpack.c.b16 %v1031, %v1030
      %v1044 = vpack.c.b16 %v1033, %v1032
      %v1045 = vpack.c.b16 %v1035, %v1034
      %v1046 = vpack.c.b16 %v1037, %v1036
      %v1047 = vpack.c.b16 %v1039, %v1038
      %v1048 = vpack.c.b16 %v1041, %v1040
      %vm1049 = vcmask 261120
      %v1051 = vsel %vm1049, %v1042, 0
      %v1054 = vsel %vm1049, %v1043, 0
      %v1057 = vsel %vm1049, %v1044, 0
      %v1060 = vsel %vm1049, %v1045, 0
      %v1063 = vsel %vm1049, %v1046, 0
      %v1066 = vsel %vm1049, %v1047, 0
      %v1069 = vsel %vm1049, %v1048, 0
      %1071 = vmatprep.subr.bf16.mxu0 0
      %1072 = vmatpush1.bf16.msra.mxu0 0
      %1073 = vmatprep.subr.bf16.mxu0 0
      %1074 = vmatpush1.bf16.msra.mxu0 0
      %1075 = vmatprep.subr.bf16.mxu0 0
      %1076 = vmatpush1.bf16.msra.mxu0 0
      %1077 = vmatprep.subr.bf16.mxu0 0
      %1078 = vmatpush1.bf16.msra.mxu0 0
      %1079 = vmatprep.subr.bf16.mxu0 0
      %1080 = vmatpush1.bf16.msra.mxu0 0
      %1081 = vmatprep.subr.bf16.mxu0 0
      %1082 = vmatpush1.bf16.msra.mxu0 0
      %1083 = vmatprep.subr.bf16.mxu0 0
      %1084 = vmatpush1.bf16.msra.mxu0 %v883
      %1085 = vmatprep.subr.bf16.mxu0 0
      %1086 = vmatpush1.bf16.msra.mxu0 %v882
      %1087 = vmatprep.subr.bf16.mxu0 0
      %1088 = vmatpush2.bf16.msra.mxu0 0
      %1089 = vmatprep.subr.bf16.mxu0 0
      %1090 = vmatpush2.bf16.msra.mxu0 0
      %1091 = vmatprep.subr.bf16.mxu0 0
      %1092 = vmatpush2.bf16.msra.mxu0 0
      %1093 = vmatprep.subr.bf16.mxu0 0
      %1094 = vmatpush2.bf16.msra.mxu0 0
      %1095 = vmatprep.subr.bf16.mxu0 0
      %1096 = vmatpush2.bf16.msra.mxu0 0
      %1097 = vmatprep.subr.bf16.mxu0 0
      %1098 = vmatpush2.bf16.msra.mxu0 0
      %1099 = vmatprep.subr.bf16.mxu0 0
      %1100 = vmatpush2.bf16.msra.mxu0 0
      %1101 = vmatprep.subr.bf16.mxu0 0
      %1102 = vmatpush2.bf16.msra.mxu0 0
      %1103 = vmatprep.mubr.bf16.mxu0 0
      %1104 = vmatmul.mubr.bf16.gmra.mxu0 %v1051
      %v1105 = vpop.f32.mrf.mxu0
      %v1106 = vadd.f32 %v947, %v1105
      %v1107 = vpop.f32.mrf.mxu0
      %v1108 = vpop.f32.mrf.mxu0
      %v1109 = vadd.f32 %v952, %v1108
      %v1110 = vpop.f32.mrf.mxu0
      %1111 = vmatprep.mubr.bf16.mxu0 0
      %1112 = vmatmul.mubr.bf16.gmra.mxu0 %v1054
      %v1113 = vpop.f32.mrf.mxu0
      %v1114 = vadd.f32 %v957, %v1113
      %v1115 = vpop.f32.mrf.mxu0
      %v1116 = vpop.f32.mrf.mxu0
      %v1117 = vadd.f32 %v962, %v1116
      %v1118 = vpop.f32.mrf.mxu0
      %1119 = vmatprep.mubr.bf16.mxu0 0
      %1120 = vmatmul.mubr.bf16.gmra.mxu0 %v1057
      %v1121 = vpop.f32.mrf.mxu0
      %v1122 = vadd.f32 %v967, %v1121
      %v1123 = vpop.f32.mrf.mxu0
      %v1124 = vpop.f32.mrf.mxu0
      %v1125 = vadd.f32 %v972, %v1124
      %v1126 = vpop.f32.mrf.mxu0
      %1127 = vmatprep.mubr.bf16.mxu0 0
      %1128 = vmatmul.mubr.bf16.gmra.mxu0 %v1060
      %v1129 = vpop.f32.mrf.mxu0
      %v1130 = vadd.f32 %v977, %v1129
      %v1131 = vpop.f32.mrf.mxu0
      %v1132 = vpop.f32.mrf.mxu0
      %v1133 = vadd.f32 %v982, %v1132
      %v1134 = vpop.f32.mrf.mxu0
      %1135 = vmatprep.mubr.bf16.mxu0 0
      %1136 = vmatmul.mubr.bf16.gmra.mxu0 %v1063
      %v1137 = vpop.f32.mrf.mxu0
      %v1138 = vadd.f32 %v987, %v1137
      %v1139 = vpop.f32.mrf.mxu0
      %v1140 = vpop.f32.mrf.mxu0
      %v1141 = vadd.f32 %v992, %v1140
      %v1142 = vpop.f32.mrf.mxu0
      %1143 = vmatprep.mubr.bf16.mxu0 0
      %1144 = vmatmul.mubr.bf16.gmra.mxu0 %v1066
      %v1145 = vpop.f32.mrf.mxu0
      %v1146 = vadd.f32 %v997, %v1145
      %v1147 = vpop.f32.mrf.mxu0
      %v1148 = vpop.f32.mrf.mxu0
      %v1149 = vadd.f32 %v1002, %v1148
      %v1150 = vpop.f32.mrf.mxu0
      %1151 = vmatprep.mubr.bf16.mxu0 0
      %1152 = vmatmul.mubr.bf16.gmra.mxu0 %v1069
      %v1153 = vpop.f32.mrf.mxu0
      %v1154 = vadd.f32 %v1007, %v1153
      %v1155 = vpop.f32.mrf.mxu0
      %v1156 = vpop.f32.mrf.mxu0
      %v1157 = vadd.f32 %v1012, %v1156
      %v1158 = vpop.f32.mrf.mxu0
      %1159 = vdwg.mxu0
      %v1160 = vpack.c.bf16 %v1109, %v1106
      %v1161 = vpack.c.bf16 %v1117, %v1114
      %v1162 = vpack.c.bf16 %v1125, %v1122
      %v1163 = vpack.c.bf16 %v1133, %v1130
      %v1164 = vpack.c.bf16 %v1141, %v1138
      %v1165 = vpack.c.bf16 %v1149, %v1146
      %v1166 = vpack.c.bf16 %v1157, %v1154
      %v1174 = vunpack.c.l.b16 %v1160
      %v1175 = vunpack.c.h.b16 %v1160
      %v1176 = vunpack.c.l.b16 %v1161
      %v1177 = vunpack.c.h.b16 %v1161
      %v1178 = vunpack.c.l.b16 %v1162
      %v1179 = vunpack.c.h.b16 %v1162
      %v1180 = vunpack.c.l.b16 %v1163
      %v1181 = vunpack.c.h.b16 %v1163
      %v1182 = vunpack.c.l.b16 %v1164
      %v1183 = vunpack.c.h.b16 %v1164
      %v1184 = vunpack.c.l.b16 %v1165
      %v1185 = vunpack.c.h.b16 %v1165
      %v1186 = vunpack.c.l.b16 %v1166
      %v1187 = vunpack.c.h.b16 %v1166
      %v1188 = vpack.c.b16 %v1174, %v1174
      %v1189 = vpack.c.b16 %v1175, %v1175
      %v1190 = vpack.c.b16 %v1176, %v1176
      %v1191 = vpack.c.b16 %v1177, %v1177
      %v1192 = vpack.c.b16 %v1178, %v1178
      %v1193 = vpack.c.b16 %v1179, %v1179
      %v1194 = vpack.c.b16 %v1180, %v1180
      %v1195 = vpack.c.b16 %v1181, %v1181
      %v1196 = vpack.c.b16 %v1182, %v1182
      %v1197 = vpack.c.b16 %v1183, %v1183
      %v1198 = vpack.c.b16 %v1184, %v1184
      %v1199 = vpack.c.b16 %v1185, %v1185
      %v1200 = vpack.c.b16 %v1186, %v1186
      %v1201 = vpack.c.b16 %v1187, %v1187
      %1216 = vst.msk [vmem:[%s404] sm:$0xf] %vm772, %v1188
      %1217 = vst.msk [vmem:[%s404 + $0x4] sm:$0xf] %vm772, %v1189
      %1218 = vst.msk [vmem:[%s404 + $0x8] sm:$0xf] %vm772, %v1190
      %1219 = vst.msk [vmem:[%s404 + $0xc] sm:$0xf] %vm772, %v1191
      %1220 = vst.msk [vmem:[%s404 + $0x10] sm:$0xf] %vm772, %v1192
      %1221 = vst.msk [vmem:[%s404 + $0x14] sm:$0xf] %vm772, %v1193
      %1222 = vst.msk [vmem:[%s404 + $0x18] sm:$0xf] %vm772, %v1194
      %1223 = vst.msk [vmem:[%s404 + $0x1c] sm:$0xf] %vm772, %v1195
      %1224 = vst.msk [vmem:[%s404 + $0x20] sm:$0xf] %vm772, %v1196
      %1225 = vst.msk [vmem:[%s404 + $0x24] sm:$0xf] %vm772, %v1197
      %1226 = vst.msk [vmem:[%s404 + $0x28] sm:$0xf] %vm772, %v1198
      %1227 = vst.msk [vmem:[%s404 + $0x2c] sm:$0xf] %vm772, %v1199
      %1228 = vst.msk [vmem:[%s404 + $0x30] sm:$0xf] %vm772, %v1200
      %1229 = vst.msk [vmem:[%s404 + $0x34] sm:$0xf] %vm772, %v1201
      %p1230 = scmp.lt.s32.totalorder %s25, 1
      %s1231 = scalar_select %p1230, %s25, 1
      %p1232 = scmp.lt.s32.totalorder %s26, 0
      %s1233 = scalar_select %p1232, %s26, 0
      %s1234 = smul.addr %s1231, 16
      %s1235 = sadd.s32 %s1233, %s1234
      %s1236 = smul.addr %s1235, 4
      %s1237 = scalar_lea.vmem %s7, %s1236
      %p1238 = scmp.lt.s32.totalorder %s25, 1
      %s1239 = scalar_select %p1238, %s25, 1
      %p1240 = scmp.lt.s32.totalorder %s26, 0
      %s1241 = scalar_select %p1240, %s26, 0
      %s1242 = smul.addr %s1239, 4
      %s1243 = sadd.s32 %s1241, %s1242
      %s1244 = smul.addr %s1243, 4
      %s1245 = scalar_lea.vmem %s8, %s1244
      %p1246 = scmp.lt.s32.totalorder %s25, 1
      %s1247 = scalar_select %p1246, %s25, 1
      %p1248 = scmp.lt.s32.totalorder %s26, 0
      %s1249 = scalar_select %p1248, %s26, 0
      %s1250 = smul.addr %s1247, 14
      %s1251 = sadd.s32 %s1249, %s1250
      %s1252 = smul.addr %s1251, 4
      %s1253 = scalar_lea.vmem %s9, %s1252
      // Predicated region
      $region49: #{tpu_custom_call.1} parent=47 // pred_check
        %p1254 = pneg %p207
      $region50: #{tpu_custom_call.1} parent=47 // pred_check_branch
        %1256 = sbr.rel (%p1254) target = $region52
      $region51: #{tpu_custom_call.1} parent=47 // pred_region
        _
      $region52: #{tpu_custom_call.1} parent=47 // pred_fallthru
        _
      // Predicated region
      $region53: #{tpu_custom_call.1} parent=47 // pred_check
        %p1257 = pneg %p235
      $region54: #{tpu_custom_call.1} parent=47 // pred_check_branch
        %1259 = sbr.rel (%p1257) target = $region56
      $region55: #{tpu_custom_call.1} parent=47 // pred_region
        _
      $region56: #{tpu_custom_call.1} parent=47 // pred_fallthru
        _
      // Predicated region
      $region57: #{tpu_custom_call.1} parent=47 // pred_check
        %p1260 = pneg %p263
      $region58: #{tpu_custom_call.1} parent=47 // pred_check_branch
        %1262 = sbr.rel (%p1260) target = $region60
      $region59: #{tpu_custom_call.1} parent=47 // pred_region
        _
      $region60: #{tpu_custom_call.1} parent=47 // pred_fallthru
        _
    $region48: #{tpu_custom_call.1} parent=5 // pred_fallthru
      _
    %p1263 = scmp.le.s32.totalorder 2, %s16
    // Predicated region
    $region61: #{tpu_custom_call.1} parent=5 // pred_check
      %p1264 = pneg %p1263
    $region62: #{tpu_custom_call.1} parent=5 // pred_check_branch
      %1266 = sbr.rel (%p1264) target = $region64
    $region63: #{tpu_custom_call.1} parent=5 // pred_region
      %s1267 = ssub.s32 %s16, 2
      // Predicated region
      $region65: #{tpu_custom_call.1} parent=63 // pred_check
        %p1268 = pneg %p213
      $region66: #{tpu_custom_call.1} parent=63 // pred_check_branch
        %1270 = sbr.rel (%p1268) target = $region68
      $region67: #{tpu_custom_call.1} parent=63 // pred_region
        %p1271 = scmp.lt.s32.totalorder %s27, 1
        %s1272 = scalar_select %p1271, %s27, 1
        %p1273 = scmp.lt.s32.totalorder %s28, 0
        %s1274 = scalar_select %p1273, %s28, 0
        %s1275 = smul.addr %s1272, 16
        %s1276 = sadd.s32 %s1274, %s1275
        %s1277 = smul.addr %s1276, 4
        %s1278 = scalar_lea.vmem %s7, %s1277
      $region68: #{tpu_custom_call.1} parent=63 // pred_fallthru
        _
      // Predicated region
      $region69: #{tpu_custom_call.1} parent=63 // pred_check
        %p1279 = pneg %p241
      $region70: #{tpu_custom_call.1} parent=63 // pred_check_branch
        %1281 = sbr.rel (%p1279) target = $region72
      $region71: #{tpu_custom_call.1} parent=63 // pred_region
        %p1282 = scmp.lt.s32.totalorder %s27, 1
        %s1283 = scalar_select %p1282, %s27, 1
        %p1284 = scmp.lt.s32.totalorder %s28, 0
        %s1285 = scalar_select %p1284, %s28, 0
        %s1286 = smul.addr %s1283, 4
        %s1287 = sadd.s32 %s1285, %s1286
        %s1288 = smul.addr %s1287, 4
        %s1289 = scalar_lea.vmem %s8, %s1288
      $region72: #{tpu_custom_call.1} parent=63 // pred_fallthru
        _
      // Predicated region
      $region73: #{tpu_custom_call.1} parent=63 // pred_check
        %p1290 = pneg %p269
      $region74: #{tpu_custom_call.1} parent=63 // pred_check_branch
        %1292 = sbr.rel (%p1290) target = $region76
      $region75: #{tpu_custom_call.1} parent=63 // pred_region
        %p1293 = scmp.lt.s32.totalorder %s27, 1
        %s1294 = scalar_select %p1293, %s27, 1
        %p1295 = scmp.lt.s32.totalorder %s28, 0
        %s1296 = scalar_select %p1295, %s28, 0
        %s1297 = smul.addr %s1294, 14
        %s1298 = sadd.s32 %s1296, %s1297
        %s1299 = smul.addr %s1298, 4
        %s1300 = scalar_lea.vmem %s9, %s1299
      $region76: #{tpu_custom_call.1} parent=63 // pred_fallthru
        _
    $region64: #{tpu_custom_call.1} parent=5 // pred_fallthru
      _
  $region6: #{tpu_custom_call.1} parent=0 // loop_footer
    %s20 = sadd.s32 1, %s16
  $region7: #{tpu_custom_call.1} parent=0 // loop_footer_branch
    %15 = sbr.rel target = $region3
  $region8: #{tpu_custom_call.1} parent=0 // loop_exit
    _

</llo_original>
